<compile_context>
chip_gen: v5e
topology: v5e:2x2
jax: 0.10.0
libtpu: 0.0.40
codegen_flags: <defaults>
</compile_context>

<pallas_src>
import functools

import numpy as np

import jax
import jax.numpy as jnp
from jax.experimental import pallas as pl
from jax.experimental.pallas import tpu as pltpu


def _upconv3x3_kernel(xu_ref, w_ref, b_ref, cm_ref, o_ref,
                      xe_ref, p_ref, acc_ref, *, Nb, C, W, L, Wm):
    # xu_ref : (Nb, C, L)       nearest-upsampled input, flattened spatial
    # w_ref  : (Cout, 9*C)      conv weights, columns ordered (ky, kx, c)
    # b_ref  : (Cout, 1)        bias (f32)
    # cm_ref : (2, L)           column-validity masks for kx=0 / kx=2 taps
    # o_ref  : (Nb, Cout, L)    output, flattened spatial (interior, no pad)
    # xe_ref : (C, L + 2*Wm)    scratch: one image with zero lane margins
    # p_ref  : (9*C, Nb*L)      scratch: im2col patches (lane axis = Nb*L)
    # acc_ref: (Cout, Nb*L)     scratch: f32 matmul result

    # Zero once per grid step; the interior is fully overwritten per item, so
    # only the margins (the conv zero-padding) actually rely on this.
    xe_ref[...] = jnp.zeros_like(xe_ref)

    for b in range(Nb):
        # Place this item's upsampled image between the zero margins.
        xe_ref[:, Wm:Wm + L] = xu_ref[b]

        # Build the 9 tap patches: each tap is a static lane shift of the
        # flattened image; the two column masks kill row-wrap artefacts and
        # implement the left/right conv padding (top/bottom padding comes
        # from the zero margins).
        for t in range(9):
            ky, kx = divmod(t, 3)
            d = (ky - 1) * W + (kx - 1)                 # static lane offset
            patch = xe_ref[:, Wm + d:Wm + d + L]        # (C, L)
            if kx == 0:                                 # source col x-1 invalid at x==0
                patch = patch * cm_ref[0:1, :]
            elif kx == 2:                               # source col x+1 invalid at x==W-1
                patch = patch * cm_ref[1:2, :]
            p_ref[t * C:(t + 1) * C, b * L:(b + 1) * L] = patch

    # One fused im2col matmul on the MXU: (Cout, 9C) @ (9C, Nb*L), f32 acc.
    acc_ref[...] = jnp.dot(w_ref[...], p_ref[...],
                           preferred_element_type=jnp.float32)

    # Bias + lane-dense stores of the exact interior (no crop needed later).
    for b in range(Nb):
        o_ref[b] = (acc_ref[:, b * L:(b + 1) * L] + b_ref[...]).astype(o_ref.dtype)


@functools.partial(jax.jit,
                   static_argnames=("scale_factor", "compute_dtype", "nb_max"))
def inverse_maxpool2d(x, weight, bias, *, scale_factor,
                      compute_dtype=jnp.bfloat16, nb_max=8):
    """Nearest-neighbour upsample by `scale_factor`, then Conv2d(3x3, pad=1) + bias.

    x: (N, C, h, w) NCHW.  weight: (Cout, C, 3, 3).  bias: (Cout,).
    """
    N, C, h, w = x.shape
    s = int(scale_factor)
    H, W = h * s, w * s
    L = H * W
    Cout = weight.shape[0]

    # Batch items per grid step (concatenated on the matmul lane axis),
    # capped by a rough VMEM budget (v7x has only 64 MiB physical VMEM).
    itemsize = jnp.dtype(compute_dtype).itemsize
    per_item_bytes = (9 * C * L * itemsize          # im2col rows for one item
                      + Cout * L * 4                # f32 acc
                      + 2 * C * L * itemsize        # double-buffered input block
                      + 2 * Cout * L * 4)           # double-buffered output block
    nb_cap = int(max(1, min(nb_max, (24 * 1024 * 1024) // max(per_item_bytes, 1))))
    Nb = max(d for d in range(1, min(N, nb_cap) + 1) if N % d == 0)

    Wm = ((W + 1 + 127) // 128) * 128   # lane margin (>= W+1, 128-aligned)
    Le = L + 2 * Wm

    # Nearest-neighbour upsample: pure data movement (fused XLA copy), no
    # quadratic operator matmul, no device scatter.
    x_up = jnp.repeat(jnp.repeat(x, s, axis=2), s, axis=3)      # (N, C, H, W)
    xu = x_up.reshape(N, C, L).astype(compute_dtype)

    # Conv weights as a single (Cout, 9C) im2col matrix; columns ordered
    # (ky, kx, c) to match the patch rows the kernel builds.
    w2 = jnp.transpose(weight, (0, 2, 3, 1)).reshape(Cout, 9 * C)
    w2 = w2.astype(compute_dtype)
    b_col = bias.reshape(Cout, 1).astype(jnp.float32)

    # Column-validity masks, built with numpy at trace time:
    #   row 0: kx=0 taps (invalid at x==0), row 1: kx=2 taps (invalid at x==W-1).
    xcol = np.arange(L) % W
    cmask = jnp.asarray(np.stack([xcol >= 1, xcol <= W - 2]).astype(np.float32),
                        dtype=compute_dtype)

    kernel = functools.partial(_upconv3x3_kernel,
                               Nb=Nb, C=C, W=W, L=L, Wm=Wm)

    out_flat = pl.pallas_call(
        kernel,
        out_shape=jax.ShapeDtypeStruct((N, Cout, L), x.dtype),
        grid=(N // Nb,),
        in_specs=[
            pl.BlockSpec((Nb, C, L), lambda g: (g, 0, 0)),
            pl.BlockSpec((Cout, 9 * C), lambda g: (0, 0)),
            pl.BlockSpec((Cout, 1), lambda g: (0, 0)),
            pl.BlockSpec((2, L), lambda g: (0, 0)),
        ],
        out_specs=pl.BlockSpec((Nb, Cout, L), lambda g: (g, 0, 0)),
        scratch_shapes=[
            pltpu.VMEM((C, Le), compute_dtype),          # margin-padded image
            pltpu.VMEM((9 * C, Nb * L), compute_dtype),  # im2col patches
            pltpu.VMEM((Cout, Nb * L), jnp.float32),     # f32 accumulator
        ],
        compiler_params=pltpu.CompilerParams(
            dimension_semantics=("parallel",),
            vmem_limit_bytes=48 * 1024 * 1024),
    )(xu, w2, b_col, cmask)

    # Free metadata reshape (flattened spatial is already the exact interior).
    return out_flat.reshape(N, Cout, H, W)


def _reference(x, weight, bias, scale_factor):
    s = int(scale_factor)
    x_up = jnp.repeat(jnp.repeat(x, s, axis=2), s, axis=3)
    out = jax.lax.conv_general_dilated(
        x_up, weight, window_strides=(1, 1), padding=((1, 1), (1, 1)),
        dimension_numbers=("NCHW", "OIHW", "NCHW"))
    return out + bias[None, :, None, None]


if __name__ == "__main__":
    key = jax.random.PRNGKey(0)
    k_x, k_w, k_b = jax.random.split(key, 3)

    N, C, h, w = 2, 4, 16, 16
    scale_factor = 2

    x = jax.random.normal(k_x, (N, C, h, w), dtype=jnp.float32)

    # Deterministic Conv2d-style init (uniform(-1/sqrt(fan_in), 1/sqrt(fan_in))).
    fan_in = C * 3 * 3
    bound = 1.0 / (fan_in ** 0.5)
    weight = jax.random.uniform(k_w, (C, C, 3, 3), jnp.float32, -bound, bound)
    bias = jax.random.uniform(k_b, (C,), jnp.float32, -bound, bound)

    ref = _reference(x, weight, bias, scale_factor)

    # f32-operand path: exact check against the XLA reference.
    out_f32 = jax.block_until_ready(
        inverse_maxpool2d(x, weight, bias, scale_factor=scale_factor,
                          compute_dtype=jnp.float32))
    assert out_f32.shape == (N, C, h * scale_factor, w * scale_factor), out_f32.shape
    assert jnp.allclose(out_f32, ref, atol=1e-4, rtol=1e-4), "f32 mismatch vs reference"

    # Default bf16-operand path (f32 MXU accumulation): looser tolerance.
    out_bf16 = jax.block_until_ready(
        inverse_maxpool2d(x, weight, bias, scale_factor=scale_factor))
    assert out_bf16.shape == (N, C, h * scale_factor, w * scale_factor), out_bf16.shape
    assert jnp.allclose(out_bf16, ref, atol=5e-2, rtol=5e-2), "bf16 mismatch vs reference"

    print("KERNEL_OK")
</pallas_src>

<mosaic_0001>
module attributes {stable_mosaic.version = 11 : i64} {
  func.func @_upconv3x3_kernel(%arg0: i32, %arg1: memref<2x4x1024xf32, #tpu.memory_space<vmem>>, %arg2: memref<4x36xf32, #tpu.memory_space<vmem>>, %arg3: memref<4x1xf32, #tpu.memory_space<vmem>>, %arg4: memref<2x1024xf32, #tpu.memory_space<vmem>>, %arg5: memref<2x4x1024xf32, #tpu.memory_space<vmem>>, %arg6: memref<4x1280xf32, #tpu.memory_space<vmem>>, %arg7: memref<36x2048xf32, #tpu.memory_space<vmem>>, %arg8: memref<4x2048xf32, #tpu.memory_space<vmem>>) attributes {dimension_semantics = [#tpu.dimension_semantics<parallel>], iteration_bounds = array<i64: 1>, scalar_prefetch = 0 : i64, scratch_operands = 3 : i64, tpu.core_type = #tpu.core_type<tc>, window_params = [{transform_indices = @transform_0, window_bounds = array<i64: 2, 4, 1024>}, {pipeline_mode = #tpu.pipeline_mode<synchronous>, transform_indices = @transform_1, window_bounds = array<i64: 4, 36>}, {pipeline_mode = #tpu.pipeline_mode<synchronous>, transform_indices = @transform_2, window_bounds = array<i64: 4, 1>}, {pipeline_mode = #tpu.pipeline_mode<synchronous>, transform_indices = @transform_3, window_bounds = array<i64: 2, 1024>}, {transform_indices = @transform_4, window_bounds = array<i64: 2, 4, 1024>}]} {
    %cst = arith.constant 0.000000e+00 : f32
    %0 = vector.broadcast %cst : f32 to vector<4x1280xf32>
    %c0 = arith.constant 0 : index
    %c0_0 = arith.constant 0 : index
    %1 = vector.load %arg6[%c0, %c0_0] : memref<4x1280xf32, #tpu.memory_space<vmem>>, vector<4x1280xf32>
    tpu.vector_store %arg6[%c0, %c0_0], %0 {strides = array<i32>} : memref<4x1280xf32, #tpu.memory_space<vmem>>, vector<4x1280xf32>,
    %c0_1 = arith.constant 0 : index
    %c0_2 = arith.constant 0 : index
    %c0_3 = arith.constant 0 : index
    %2 = vector.load %arg1[%c0_1, %c0_2, %c0_3] : memref<2x4x1024xf32, #tpu.memory_space<vmem>>, vector<1x4x1024xf32>
    %3 = vector.shape_cast %2 : vector<1x4x1024xf32> to vector<4x1024xf32>
    %c0_4 = arith.constant 0 : index
    %c128 = arith.constant 128 : index
    %4 = vector.load %arg6[%c0_4, %c128] : memref<4x1280xf32, #tpu.memory_space<vmem>>, vector<4x1024xf32>
    tpu.vector_store %arg6[%c0_4, %c128], %3 {strides = array<i32>} : memref<4x1280xf32, #tpu.memory_space<vmem>>, vector<4x1024xf32>,
    %c0_5 = arith.constant 0 : index
    %c95 = arith.constant 95 : index
    %5 = vector.load %arg6[%c0_5, %c95] : memref<4x1280xf32, #tpu.memory_space<vmem>>, vector<4x1024xf32>
    %c0_6 = arith.constant 0 : index
    %c0_7 = arith.constant 0 : index
    %6 = vector.load %arg4[%c0_6, %c0_7] : memref<2x1024xf32, #tpu.memory_space<vmem>>, vector<1x1024xf32>
    %7 = vector.broadcast %6 : vector<1x1024xf32> to vector<4x1024xf32>
    %8 = arith.mulf %5, %7 : vector<4x1024xf32>
    %c0_8 = arith.constant 0 : index
    %c0_9 = arith.constant 0 : index
    %9 = vector.load %arg7[%c0_8, %c0_9] : memref<36x2048xf32, #tpu.memory_space<vmem>>, vector<4x1024xf32>
    tpu.vector_store %arg7[%c0_8, %c0_9], %8 {strides = array<i32>} : memref<36x2048xf32, #tpu.memory_space<vmem>>, vector<4x1024xf32>,
    %c0_10 = arith.constant 0 : index
    %c96 = arith.constant 96 : index
    %10 = vector.load %arg6[%c0_10, %c96] : memref<4x1280xf32, #tpu.memory_space<vmem>>, vector<4x1024xf32>
    %c4 = arith.constant 4 : index
    %c0_11 = arith.constant 0 : index
    %11 = vector.load %arg7[%c4, %c0_11] : memref<36x2048xf32, #tpu.memory_space<vmem>>, vector<4x1024xf32>
    tpu.vector_store %arg7[%c4, %c0_11], %10 {strides = array<i32>} : memref<36x2048xf32, #tpu.memory_space<vmem>>, vector<4x1024xf32>,
    %c0_12 = arith.constant 0 : index
    %c97 = arith.constant 97 : index
    %12 = vector.load %arg6[%c0_12, %c97] : memref<4x1280xf32, #tpu.memory_space<vmem>>, vector<4x1024xf32>
    %c1 = arith.constant 1 : index
    %c0_13 = arith.constant 0 : index
    %13 = vector.load %arg4[%c1, %c0_13] : memref<2x1024xf32, #tpu.memory_space<vmem>>, vector<1x1024xf32>
    %14 = vector.broadcast %13 : vector<1x1024xf32> to vector<4x1024xf32>
    %15 = arith.mulf %12, %14 : vector<4x1024xf32>
    %c8 = arith.constant 8 : index
    %c0_14 = arith.constant 0 : index
    %16 = vector.load %arg7[%c8, %c0_14] : memref<36x2048xf32, #tpu.memory_space<vmem>>, vector<4x1024xf32>
    tpu.vector_store %arg7[%c8, %c0_14], %15 {strides = array<i32>} : memref<36x2048xf32, #tpu.memory_space<vmem>>, vector<4x1024xf32>,
    %c0_15 = arith.constant 0 : index
    %c127 = arith.constant 127 : index
    %17 = vector.load %arg6[%c0_15, %c127] : memref<4x1280xf32, #tpu.memory_space<vmem>>, vector<4x1024xf32>
    %c0_16 = arith.constant 0 : index
    %c0_17 = arith.constant 0 : index
    %18 = vector.load %arg4[%c0_16, %c0_17] : memref<2x1024xf32, #tpu.memory_space<vmem>>, vector<1x1024xf32>
    %19 = vector.broadcast %18 : vector<1x1024xf32> to vector<4x1024xf32>
    %20 = arith.mulf %17, %19 : vector<4x1024xf32>
    %c12 = arith.constant 12 : index
    %c0_18 = arith.constant 0 : index
    %21 = vector.load %arg7[%c12, %c0_18] : memref<36x2048xf32, #tpu.memory_space<vmem>>, vector<4x1024xf32>
    tpu.vector_store %arg7[%c12, %c0_18], %20 {strides = array<i32>} : memref<36x2048xf32, #tpu.memory_space<vmem>>, vector<4x1024xf32>,
    %c0_19 = arith.constant 0 : index
    %c128_20 = arith.constant 128 : index
    %22 = vector.load %arg6[%c0_19, %c128_20] : memref<4x1280xf32, #tpu.memory_space<vmem>>, vector<4x1024xf32>
    %c16 = arith.constant 16 : index
    %c0_21 = arith.constant 0 : index
    %23 = vector.load %arg7[%c16, %c0_21] : memref<36x2048xf32, #tpu.memory_space<vmem>>, vector<4x1024xf32>
    tpu.vector_store %arg7[%c16, %c0_21], %22 {strides = array<i32>} : memref<36x2048xf32, #tpu.memory_space<vmem>>, vector<4x1024xf32>,
    %c0_22 = arith.constant 0 : index
    %c129 = arith.constant 129 : index
    %24 = vector.load %arg6[%c0_22, %c129] : memref<4x1280xf32, #tpu.memory_space<vmem>>, vector<4x1024xf32>
    %c1_23 = arith.constant 1 : index
    %c0_24 = arith.constant 0 : index
    %25 = vector.load %arg4[%c1_23, %c0_24] : memref<2x1024xf32, #tpu.memory_space<vmem>>, vector<1x1024xf32>
    %26 = vector.broadcast %25 : vector<1x1024xf32> to vector<4x1024xf32>
    %27 = arith.mulf %24, %26 : vector<4x1024xf32>
    %c20 = arith.constant 20 : index
    %c0_25 = arith.constant 0 : index
    %28 = vector.load %arg7[%c20, %c0_25] : memref<36x2048xf32, #tpu.memory_space<vmem>>, vector<4x1024xf32>
    tpu.vector_store %arg7[%c20, %c0_25], %27 {strides = array<i32>} : memref<36x2048xf32, #tpu.memory_space<vmem>>, vector<4x1024xf32>,
    %c0_26 = arith.constant 0 : index
    %c159 = arith.constant 159 : index
    %29 = vector.load %arg6[%c0_26, %c159] : memref<4x1280xf32, #tpu.memory_space<vmem>>, vector<4x1024xf32>
    %c0_27 = arith.constant 0 : index
    %c0_28 = arith.constant 0 : index
    %30 = vector.load %arg4[%c0_27, %c0_28] : memref<2x1024xf32, #tpu.memory_space<vmem>>, vector<1x1024xf32>
    %31 = vector.broadcast %30 : vector<1x1024xf32> to vector<4x1024xf32>
    %32 = arith.mulf %29, %31 : vector<4x1024xf32>
    %c24 = arith.constant 24 : index
    %c0_29 = arith.constant 0 : index
    %33 = vector.load %arg7[%c24, %c0_29] : memref<36x2048xf32, #tpu.memory_space<vmem>>, vector<4x1024xf32>
    tpu.vector_store %arg7[%c24, %c0_29], %32 {strides = array<i32>} : memref<36x2048xf32, #tpu.memory_space<vmem>>, vector<4x1024xf32>,
    %c0_30 = arith.constant 0 : index
    %c160 = arith.constant 160 : index
    %34 = vector.load %arg6[%c0_30, %c160] : memref<4x1280xf32, #tpu.memory_space<vmem>>, vector<4x1024xf32>
    %c28 = arith.constant 28 : index
    %c0_31 = arith.constant 0 : index
    %35 = vector.load %arg7[%c28, %c0_31] : memref<36x2048xf32, #tpu.memory_space<vmem>>, vector<4x1024xf32>
    tpu.vector_store %arg7[%c28, %c0_31], %34 {strides = array<i32>} : memref<36x2048xf32, #tpu.memory_space<vmem>>, vector<4x1024xf32>,
    %c0_32 = arith.constant 0 : index
    %c161 = arith.constant 161 : index
    %36 = vector.load %arg6[%c0_32, %c161] : memref<4x1280xf32, #tpu.memory_space<vmem>>, vector<4x1024xf32>
    %c1_33 = arith.constant 1 : index
    %c0_34 = arith.constant 0 : index
    %37 = vector.load %arg4[%c1_33, %c0_34] : memref<2x1024xf32, #tpu.memory_space<vmem>>, vector<1x1024xf32>
    %38 = vector.broadcast %37 : vector<1x1024xf32> to vector<4x1024xf32>
    %39 = arith.mulf %36, %38 : vector<4x1024xf32>
    %c32 = arith.constant 32 : index
    %c0_35 = arith.constant 0 : index
    %40 = vector.load %arg7[%c32, %c0_35] : memref<36x2048xf32, #tpu.memory_space<vmem>>, vector<4x1024xf32>
    tpu.vector_store %arg7[%c32, %c0_35], %39 {strides = array<i32>} : memref<36x2048xf32, #tpu.memory_space<vmem>>, vector<4x1024xf32>,
    %c1_36 = arith.constant 1 : index
    %c0_37 = arith.constant 0 : index
    %c0_38 = arith.constant 0 : index
    %41 = vector.load %arg1[%c1_36, %c0_37, %c0_38] : memref<2x4x1024xf32, #tpu.memory_space<vmem>>, vector<1x4x1024xf32>
    %42 = vector.shape_cast %41 : vector<1x4x1024xf32> to vector<4x1024xf32>
    %c0_39 = arith.constant 0 : index
    %c128_40 = arith.constant 128 : index
    %43 = vector.load %arg6[%c0_39, %c128_40] : memref<4x1280xf32, #tpu.memory_space<vmem>>, vector<4x1024xf32>
    tpu.vector_store %arg6[%c0_39, %c128_40], %42 {strides = array<i32>} : memref<4x1280xf32, #tpu.memory_space<vmem>>, vector<4x1024xf32>,
    %c0_41 = arith.constant 0 : index
    %c95_42 = arith.constant 95 : index
    %44 = vector.load %arg6[%c0_41, %c95_42] : memref<4x1280xf32, #tpu.memory_space<vmem>>, vector<4x1024xf32>
    %c0_43 = arith.constant 0 : index
    %c0_44 = arith.constant 0 : index
    %45 = vector.load %arg4[%c0_43, %c0_44] : memref<2x1024xf32, #tpu.memory_space<vmem>>, vector<1x1024xf32>
    %46 = vector.broadcast %45 : vector<1x1024xf32> to vector<4x1024xf32>
    %47 = arith.mulf %44, %46 : vector<4x1024xf32>
    %c0_45 = arith.constant 0 : index
    %c1024 = arith.constant 1024 : index
    %48 = vector.load %arg7[%c0_45, %c1024] : memref<36x2048xf32, #tpu.memory_space<vmem>>, vector<4x1024xf32>
    tpu.vector_store %arg7[%c0_45, %c1024], %47 {strides = array<i32>} : memref<36x2048xf32, #tpu.memory_space<vmem>>, vector<4x1024xf32>,
    %c0_46 = arith.constant 0 : index
    %c96_47 = arith.constant 96 : index
    %49 = vector.load %arg6[%c0_46, %c96_47] : memref<4x1280xf32, #tpu.memory_space<vmem>>, vector<4x1024xf32>
    %c4_48 = arith.constant 4 : index
    %c1024_49 = arith.constant 1024 : index
    %50 = vector.load %arg7[%c4_48, %c1024_49] : memref<36x2048xf32, #tpu.memory_space<vmem>>, vector<4x1024xf32>
    tpu.vector_store %arg7[%c4_48, %c1024_49], %49 {strides = array<i32>} : memref<36x2048xf32, #tpu.memory_space<vmem>>, vector<4x1024xf32>,
    %c0_50 = arith.constant 0 : index
    %c97_51 = arith.constant 97 : index
    %51 = vector.load %arg6[%c0_50, %c97_51] : memref<4x1280xf32, #tpu.memory_space<vmem>>, vector<4x1024xf32>
    %c1_52 = arith.constant 1 : index
    %c0_53 = arith.constant 0 : index
    %52 = vector.load %arg4[%c1_52, %c0_53] : memref<2x1024xf32, #tpu.memory_space<vmem>>, vector<1x1024xf32>
    %53 = vector.broadcast %52 : vector<1x1024xf32> to vector<4x1024xf32>
    %54 = arith.mulf %51, %53 : vector<4x1024xf32>
    %c8_54 = arith.constant 8 : index
    %c1024_55 = arith.constant 1024 : index
    %55 = vector.load %arg7[%c8_54, %c1024_55] : memref<36x2048xf32, #tpu.memory_space<vmem>>, vector<4x1024xf32>
    tpu.vector_store %arg7[%c8_54, %c1024_55], %54 {strides = array<i32>} : memref<36x2048xf32, #tpu.memory_space<vmem>>, vector<4x1024xf32>,
    %c0_56 = arith.constant 0 : index
    %c127_57 = arith.constant 127 : index
    %56 = vector.load %arg6[%c0_56, %c127_57] : memref<4x1280xf32, #tpu.memory_space<vmem>>, vector<4x1024xf32>
    %c0_58 = arith.constant 0 : index
    %c0_59 = arith.constant 0 : index
    %57 = vector.load %arg4[%c0_58, %c0_59] : memref<2x1024xf32, #tpu.memory_space<vmem>>, vector<1x1024xf32>
    %58 = vector.broadcast %57 : vector<1x1024xf32> to vector<4x1024xf32>
    %59 = arith.mulf %56, %58 : vector<4x1024xf32>
    %c12_60 = arith.constant 12 : index
    %c1024_61 = arith.constant 1024 : index
    %60 = vector.load %arg7[%c12_60, %c1024_61] : memref<36x2048xf32, #tpu.memory_space<vmem>>, vector<4x1024xf32>
    tpu.vector_store %arg7[%c12_60, %c1024_61], %59 {strides = array<i32>} : memref<36x2048xf32, #tpu.memory_space<vmem>>, vector<4x1024xf32>,
    %c0_62 = arith.constant 0 : index
    %c128_63 = arith.constant 128 : index
    %61 = vector.load %arg6[%c0_62, %c128_63] : memref<4x1280xf32, #tpu.memory_space<vmem>>, vector<4x1024xf32>
    %c16_64 = arith.constant 16 : index
    %c1024_65 = arith.constant 1024 : index
    %62 = vector.load %arg7[%c16_64, %c1024_65] : memref<36x2048xf32, #tpu.memory_space<vmem>>, vector<4x1024xf32>
    tpu.vector_store %arg7[%c16_64, %c1024_65], %61 {strides = array<i32>} : memref<36x2048xf32, #tpu.memory_space<vmem>>, vector<4x1024xf32>,
    %c0_66 = arith.constant 0 : index
    %c129_67 = arith.constant 129 : index
    %63 = vector.load %arg6[%c0_66, %c129_67] : memref<4x1280xf32, #tpu.memory_space<vmem>>, vector<4x1024xf32>
    %c1_68 = arith.constant 1 : index
    %c0_69 = arith.constant 0 : index
    %64 = vector.load %arg4[%c1_68, %c0_69] : memref<2x1024xf32, #tpu.memory_space<vmem>>, vector<1x1024xf32>
    %65 = vector.broadcast %64 : vector<1x1024xf32> to vector<4x1024xf32>
    %66 = arith.mulf %63, %65 : vector<4x1024xf32>
    %c20_70 = arith.constant 20 : index
    %c1024_71 = arith.constant 1024 : index
    %67 = vector.load %arg7[%c20_70, %c1024_71] : memref<36x2048xf32, #tpu.memory_space<vmem>>, vector<4x1024xf32>
    tpu.vector_store %arg7[%c20_70, %c1024_71], %66 {strides = array<i32>} : memref<36x2048xf32, #tpu.memory_space<vmem>>, vector<4x1024xf32>,
    %c0_72 = arith.constant 0 : index
    %c159_73 = arith.constant 159 : index
    %68 = vector.load %arg6[%c0_72, %c159_73] : memref<4x1280xf32, #tpu.memory_space<vmem>>, vector<4x1024xf32>
    %c0_74 = arith.constant 0 : index
    %c0_75 = arith.constant 0 : index
    %69 = vector.load %arg4[%c0_74, %c0_75] : memref<2x1024xf32, #tpu.memory_space<vmem>>, vector<1x1024xf32>
    %70 = vector.broadcast %69 : vector<1x1024xf32> to vector<4x1024xf32>
    %71 = arith.mulf %68, %70 : vector<4x1024xf32>
    %c24_76 = arith.constant 24 : index
    %c1024_77 = arith.constant 1024 : index
    %72 = vector.load %arg7[%c24_76, %c1024_77] : memref<36x2048xf32, #tpu.memory_space<vmem>>, vector<4x1024xf32>
    tpu.vector_store %arg7[%c24_76, %c1024_77], %71 {strides = array<i32>} : memref<36x2048xf32, #tpu.memory_space<vmem>>, vector<4x1024xf32>,
    %c0_78 = arith.constant 0 : index
    %c160_79 = arith.constant 160 : index
    %73 = vector.load %arg6[%c0_78, %c160_79] : memref<4x1280xf32, #tpu.memory_space<vmem>>, vector<4x1024xf32>
    %c28_80 = arith.constant 28 : index
    %c1024_81 = arith.constant 1024 : index
    %74 = vector.load %arg7[%c28_80, %c1024_81] : memref<36x2048xf32, #tpu.memory_space<vmem>>, vector<4x1024xf32>
    tpu.vector_store %arg7[%c28_80, %c1024_81], %73 {strides = array<i32>} : memref<36x2048xf32, #tpu.memory_space<vmem>>, vector<4x1024xf32>,
    %c0_82 = arith.constant 0 : index
    %c161_83 = arith.constant 161 : index
    %75 = vector.load %arg6[%c0_82, %c161_83] : memref<4x1280xf32, #tpu.memory_space<vmem>>, vector<4x1024xf32>
    %c1_84 = arith.constant 1 : index
    %c0_85 = arith.constant 0 : index
    %76 = vector.load %arg4[%c1_84, %c0_85] : memref<2x1024xf32, #tpu.memory_space<vmem>>, vector<1x1024xf32>
    %77 = vector.broadcast %76 : vector<1x1024xf32> to vector<4x1024xf32>
    %78 = arith.mulf %75, %77 : vector<4x1024xf32>
    %c32_86 = arith.constant 32 : index
    %c1024_87 = arith.constant 1024 : index
    %79 = vector.load %arg7[%c32_86, %c1024_87] : memref<36x2048xf32, #tpu.memory_space<vmem>>, vector<4x1024xf32>
    tpu.vector_store %arg7[%c32_86, %c1024_87], %78 {strides = array<i32>} : memref<36x2048xf32, #tpu.memory_space<vmem>>, vector<4x1024xf32>,
    %c0_88 = arith.constant 0 : index
    %c0_89 = arith.constant 0 : index
    %80 = vector.load %arg2[%c0_88, %c0_89] : memref<4x36xf32, #tpu.memory_space<vmem>>, vector<4x36xf32>
    %c0_90 = arith.constant 0 : index
    %c0_91 = arith.constant 0 : index
    %81 = vector.load %arg7[%c0_90, %c0_91] : memref<36x2048xf32, #tpu.memory_space<vmem>>, vector<36x2048xf32>
    %cst_92 = arith.constant dense<0.000000e+00> : vector<4x2048xf32>
    %82 = tpu.matmul %80, %81, %cst_92 {dimension_numbers = #tpu.dot_dimension_numbers<[1], [0], [0], [1], [0, 0, 1, 1], [], []>} : vector<4x36xf32>, vector<36x2048xf32>, vector<4x2048xf32> -> vector<4x2048xf32>
    %c0_93 = arith.constant 0 : index
    %c0_94 = arith.constant 0 : index
    %83 = vector.load %arg8[%c0_93, %c0_94] : memref<4x2048xf32, #tpu.memory_space<vmem>>, vector<4x2048xf32>
    tpu.vector_store %arg8[%c0_93, %c0_94], %82 {strides = array<i32>} : memref<4x2048xf32, #tpu.memory_space<vmem>>, vector<4x2048xf32>,
    %c0_95 = arith.constant 0 : index
    %c0_96 = arith.constant 0 : index
    %84 = vector.load %arg8[%c0_95, %c0_96] : memref<4x2048xf32, #tpu.memory_space<vmem>>, vector<4x1024xf32>
    %c0_97 = arith.constant 0 : index
    %c0_98 = arith.constant 0 : index
    %85 = vector.load %arg3[%c0_97, %c0_98] : memref<4x1xf32, #tpu.memory_space<vmem>>, vector<4x1xf32>
    %86 = vector.broadcast %85 : vector<4x1xf32> to vector<4x1024xf32>
    %87 = arith.addf %84, %86 : vector<4x1024xf32>
    %c0_99 = arith.constant 0 : index
    %c0_100 = arith.constant 0 : index
    %c0_101 = arith.constant 0 : index
    %88 = vector.load %arg5[%c0_99, %c0_100, %c0_101] : memref<2x4x1024xf32, #tpu.memory_space<vmem>>, vector<1x4x1024xf32>
    %89 = vector.shape_cast %88 : vector<1x4x1024xf32> to vector<4x1024xf32>
    %90 = vector.shape_cast %87 : vector<4x1024xf32> to vector<1x4x1024xf32>
    tpu.vector_store %arg5[%c0_99, %c0_100, %c0_101], %90 {strides = array<i32>} : memref<2x4x1024xf32, #tpu.memory_space<vmem>>, vector<1x4x1024xf32>,
    %c0_102 = arith.constant 0 : index
    %c1024_103 = arith.constant 1024 : index
    %91 = vector.load %arg8[%c0_102, %c1024_103] : memref<4x2048xf32, #tpu.memory_space<vmem>>, vector<4x1024xf32>
    %c0_104 = arith.constant 0 : index
    %c0_105 = arith.constant 0 : index
    %92 = vector.load %arg3[%c0_104, %c0_105] : memref<4x1xf32, #tpu.memory_space<vmem>>, vector<4x1xf32>
    %93 = vector.broadcast %92 : vector<4x1xf32> to vector<4x1024xf32>
    %94 = arith.addf %91, %93 : vector<4x1024xf32>
    %c1_106 = arith.constant 1 : index
    %c0_107 = arith.constant 0 : index
    %c0_108 = arith.constant 0 : index
    %95 = vector.load %arg5[%c1_106, %c0_107, %c0_108] : memref<2x4x1024xf32, #tpu.memory_space<vmem>>, vector<1x4x1024xf32>
    %96 = vector.shape_cast %95 : vector<1x4x1024xf32> to vector<4x1024xf32>
    %97 = vector.shape_cast %94 : vector<4x1024xf32> to vector<1x4x1024xf32>
    tpu.vector_store %arg5[%c1_106, %c0_107, %c0_108], %97 {strides = array<i32>} : memref<2x4x1024xf32, #tpu.memory_space<vmem>>, vector<1x4x1024xf32>,
    return
  }
  func.func @transform_0(%arg0: i32) -> (i32, i32, i32) {
    %c0_i32 = arith.constant 0 : i32
    %c0_i32_0 = arith.constant 0 : i32
    %c0_i32_1 = arith.constant 0 : i32
    return %arg0, %c0_i32, %c0_i32_0 : i32, i32, i32
  }
  func.func @transform_1(%arg0: i32) -> (i32, i32) {
    %c0_i32 = arith.constant 0 : i32
    %c0_i32_0 = arith.constant 0 : i32
    %c0_i32_1 = arith.constant 0 : i32
    return %c0_i32, %c0_i32_0 : i32, i32
  }
  func.func @transform_2(%arg0: i32) -> (i32, i32) {
    %c0_i32 = arith.constant 0 : i32
    %c0_i32_0 = arith.constant 0 : i32
    %c0_i32_1 = arith.constant 0 : i32
    return %c0_i32, %c0_i32_0 : i32, i32
  }
  func.func @transform_3(%arg0: i32) -> (i32, i32) {
    %c0_i32 = arith.constant 0 : i32
    %c0_i32_0 = arith.constant 0 : i32
    %c0_i32_1 = arith.constant 0 : i32
    return %c0_i32, %c0_i32_0 : i32, i32
  }
  func.func @transform_4(%arg0: i32) -> (i32, i32, i32) {
    %c0_i32 = arith.constant 0 : i32
    %c0_i32_0 = arith.constant 0 : i32
    %c0_i32_1 = arith.constant 0 : i32
    return %arg0, %c0_i32, %c0_i32_0 : i32, i32, i32
  }
}

</mosaic_0001>

<llo_original>
// kernel: inverse_maxpool2d.1
$region0: #{inverse_maxpool2d.1}
  #allocation0 [shape = 'u32[]', space=smem, size = 0x4, offset = 0x4, fixed_abs, tag = 'smem constant byte address 0x4 - core index']
  #allocation1 [shape = 'u32[72,128]{1,0:T(1,128)}', space=vmem, size = 0x9000, scoped, tag = 'internal scratch']
  #allocation2 [shape = 'f32[4,1280]{1,0:T(4,128)}', space=vmem, size = 0x5000, scoped, tag = 'scratch operand']
  #allocation3 [shape = 'f32[36,2048]{1,0:T(8,128)}', space=vmem, size = 0x50000, scoped, tag = 'scratch operand']
  #allocation4 [shape = 'f32[4,2048]{1,0:T(4,128)}', space=vmem, size = 0x8000, scoped, tag = 'scratch operand']
  %s0 = inlined_call_operand.vmem [shape: f32[2,4,1024], index: 0, kind: input, shape index: {}]
  %s1 = inlined_call_operand.vmem [shape: f32[4,36], index: 1, kind: input, shape index: {}]
  %s2 = inlined_call_operand.vmem [shape: f32[4,1], index: 2, kind: input, shape index: {}]
  %s3 = inlined_call_operand.vmem [shape: f32[2,1024], index: 3, kind: input, shape index: {}]
  %s4 = inlined_call_operand.vmem [shape: f32[2,4,1024], index: 4, kind: output, shape index: {}]
  %s5 = sld [smem:[#allocation0]]
  $region26: #{inverse_maxpool2d.1} parent=0
    _
  %s7 = ssub.s32 1, %s5
  %s8 = scalar_select 0, %s7, %s5
  // Predicated region
  $region2: #{inverse_maxpool2d.1} parent=0 // pred_check
    _
  $region3: #{inverse_maxpool2d.1} parent=0 // pred_check_branch
    %10 = sbr.rel (0) target = $region5
  $region4: #{inverse_maxpool2d.1} parent=0 // pred_region
    _
  $region5: #{inverse_maxpool2d.1} parent=0 // pred_fallthru
    _
  // Predicated region
  $region6: #{inverse_maxpool2d.1} parent=0 // pred_check
    _
  $region7: #{inverse_maxpool2d.1} parent=0 // pred_check_branch
    %12 = sbr.rel (0) target = $region9
  $region8: #{inverse_maxpool2d.1} parent=0 // pred_region
    _
  $region9: #{inverse_maxpool2d.1} parent=0 // pred_fallthru
    _
  // Predicated region
  $region10: #{inverse_maxpool2d.1} parent=0 // pred_check
    _
  $region11: #{inverse_maxpool2d.1} parent=0 // pred_check_branch
    %14 = sbr.rel (0) target = $region13
  $region12: #{inverse_maxpool2d.1} parent=0 // pred_region
    _
  $region13: #{inverse_maxpool2d.1} parent=0 // pred_fallthru
    _
  // Predicated region
  $region14: #{inverse_maxpool2d.1} parent=0 // pred_check
    _
  $region15: #{inverse_maxpool2d.1} parent=0 // pred_check_branch
    %16 = sbr.rel (0) target = $region17
  $region16: #{inverse_maxpool2d.1} parent=0 // pred_region
    _
  $region17: #{inverse_maxpool2d.1} parent=0 // pred_fallthru
    _
  %17 = vst [vmem:[#allocation2] sm:$0xff] 0.0
  %18 = vst [vmem:[#allocation2 + $0x8] sm:$0xff] 0.0
  %19 = vst [vmem:[#allocation2 + $0x10] sm:$0xff] 0.0
  %20 = vst [vmem:[#allocation2 + $0x18] sm:$0xff] 0.0
  %21 = vst [vmem:[#allocation2 + $0x20] sm:$0xff] 0.0
  %v22 = vld [vmem:[%s0] sm:$0xff]
  %v23 = vld [vmem:[%s0 + $0x8] sm:$0xff]
  %v24 = vld [vmem:[%s0 + $0x10] sm:$0xff]
  %v25 = vld [vmem:[%s0 + $0x18] sm:$0xff]
  %26 = vst [vmem:[#allocation2 + $0x4] sm:$0xff] %v22
  %27 = vst [vmem:[#allocation2 + $0xc] sm:$0xff] %v23
  %28 = vst [vmem:[#allocation2 + $0x14] sm:$0xff] %v24
  %29 = vst [vmem:[#allocation2 + $0x1c] sm:$0xff] %v25
  %v30 = vld [vmem:[#allocation2] sm:$0xff]
  %v31 = vld [vmem:[#allocation2 + $0x8] sm:$0xff]
  %v32 = vld [vmem:[#allocation2 + $0x10] sm:$0xff]
  %v33 = vld [vmem:[#allocation2 + $0x18] sm:$0xff]
  %v34 = vld [vmem:[#allocation2 + $0x20] sm:$0xf]
  %v35 = vld [vmem:[%s3] ss:$2 sm:$0xff]
  %v37 = vperm.slane %v35, 0
  %v38 = vperm.slane %v35, 1
  %v39 = vperm.slane %v35, 2
  %v40 = vperm.slane %v35, 3
  %v41 = vperm.slane %v35, 4
  %v42 = vperm.slane %v35, 5
  %v43 = vperm.slane %v35, 6
  %v44 = vperm.slane %v35, 7
  %v45 = vrot.slane %v38, 4
  %v46 = vrot.slane %v40, 4
  %v47 = vrot.slane %v42, 4
  %v48 = vrot.slane %v44, 4
  %vm49 = vcmask 1043456
  %v50 = vsel %vm49, %v37, %v45
  %v51 = vsel %vm49, %v39, %v46
  %v52 = vsel %vm49, %v41, %v47
  %v53 = vsel %vm49, %v43, %v48
  %54 = vrot.lane.b32.xlu0 %v50, 95
  %v55 = vpop.permute.xlu0 %54
  %56 = vrot.lane.b32.xlu0 %v51, 95
  %v57 = vpop.permute.xlu0 %56
  %58 = vrot.lane.b32.xlu0 %v52, 95
  %v59 = vpop.permute.xlu0 %58
  %60 = vrot.lane.b32.xlu0 %v53, 95
  %v61 = vpop.permute.xlu0 %60
  %v62 = vrot.slane %v55, 4
  %v63 = vrot.slane %v57, 4
  %v64 = vrot.slane %v59, 4
  %v65 = vrot.slane %v61, 4
  %vm66 = vcmask 777216
  %v67 = vsel %vm66, %v62, %v55
  %v68 = vsel %vm49, %v62, %v63
  %v69 = vsel %vm66, %v68, %v57
  %v70 = vsel %vm49, %v63, %v64
  %v71 = vsel %vm66, %v70, %v59
  %v72 = vsel %vm49, %v64, %v65
  %v73 = vsel %vm66, %v72, %v61
  %v79 = vmul.f32 %v30, %v67
  %v80 = vmul.f32 %v31, %v69
  %v81 = vmul.f32 %v32, %v71
  %v82 = vmul.f32 %v33, %v73
  %v83 = vmul.f32 %v34, %v65
  %89 = vst [vmem:[#allocation1] ss:$2 sm:$0xff] %v79
  %s90 = scalar_lea.vmem [#allocation1], 16
  %91 = vst [vmem:[%s90] ss:$2 sm:$0xff] %v80
  %s92 = scalar_lea.vmem [#allocation1], 32
  %93 = vst [vmem:[%s92] ss:$2 sm:$0xff] %v81
  %s94 = scalar_lea.vmem [#allocation1], 48
  %95 = vst [vmem:[%s94] ss:$2 sm:$0xff] %v82
  %v96 = vld.sshfl [vmem:[#allocation1] sm:$0xff pattern:$0x75316420]
  %v97 = vld.sshfl [vmem:[#allocation1 + $0x8] sm:$0xff pattern:$0x75316420]
  %v98 = vld.sshfl [vmem:[#allocation1 + $0x10] sm:$0xff pattern:$0x75316420]
  %v99 = vld.sshfl [vmem:[#allocation1 + $0x18] sm:$0xff pattern:$0x75316420]
  %v100 = vld.sshfl [vmem:[#allocation1 + $0x20] sm:$0xff pattern:$0x75316420]
  %v101 = vld.sshfl [vmem:[#allocation1 + $0x28] sm:$0xff pattern:$0x75316420]
  %v102 = vld.sshfl [vmem:[#allocation1 + $0x30] sm:$0xff pattern:$0x75316420]
  %v103 = vld.sshfl [vmem:[#allocation1 + $0x38] sm:$0xff pattern:$0x75316420]
  %104 = vst [vmem:[#allocation1] ss:$2 sm:$0xff] %v83
  %v105 = vld.sshfl [vmem:[#allocation1] sm:$0xff pattern:$0x75316420]
  %106 = vrot.lane.b32.xlu0 %v96, 33
  %v107 = vpop.permute.xlu0 %106
  %108 = vrot.lane.b32.xlu0 %v97, 33
  %v109 = vpop.permute.xlu0 %108
  %110 = vrot.lane.b32.xlu0 %v98, 33
  %v111 = vpop.permute.xlu0 %110
  %112 = vrot.lane.b32.xlu0 %v99, 33
  %v113 = vpop.permute.xlu0 %112
  %114 = vrot.lane.b32.xlu0 %v100, 33
  %v115 = vpop.permute.xlu0 %114
  %116 = vrot.lane.b32.xlu0 %v101, 33
  %v117 = vpop.permute.xlu0 %116
  %118 = vrot.lane.b32.xlu0 %v102, 33
  %v119 = vpop.permute.xlu0 %118
  %120 = vrot.lane.b32.xlu0 %v103, 33
  %v121 = vpop.permute.xlu0 %120
  %122 = vrot.lane.b32.xlu0 %v105, 33
  %v123 = vpop.permute.xlu0 %122
  %vm124 = vcmask 269312
  %v125 = vsel %vm124, %v107, %v109
  %v126 = vsel %vm124, %v109, %v111
  %v127 = vsel %vm124, %v111, %v113
  %v128 = vsel %vm124, %v113, %v115
  %v129 = vsel %vm124, %v115, %v117
  %v130 = vsel %vm124, %v117, %v119
  %v131 = vsel %vm124, %v119, %v121
  %v132 = vsel %vm124, %v121, %v123
  %141 = vst [vmem:[#allocation3] sm:$0xf] %v125
  %142 = vst [vmem:[#allocation3 + $0x8] sm:$0xf] %v126
  %143 = vst [vmem:[#allocation3 + $0x10] sm:$0xf] %v127
  %144 = vst [vmem:[#allocation3 + $0x18] sm:$0xf] %v128
  %145 = vst [vmem:[#allocation3 + $0x20] sm:$0xf] %v129
  %146 = vst [vmem:[#allocation3 + $0x28] sm:$0xf] %v130
  %147 = vst [vmem:[#allocation3 + $0x30] sm:$0xf] %v131
  %148 = vst [vmem:[#allocation3 + $0x38] sm:$0xf] %v132
  %v149 = vld [vmem:[#allocation2] sm:$0xff]
  %v150 = vld [vmem:[#allocation2 + $0x8] sm:$0xff]
  %v151 = vld [vmem:[#allocation2 + $0x10] sm:$0xff]
  %v152 = vld [vmem:[#allocation2 + $0x18] sm:$0xff]
  %v153 = vld [vmem:[#allocation2 + $0x20] sm:$0xf]
  %s159 = scalar_lea.vmem [#allocation1], 1
  %160 = vst [vmem:[%s159] ss:$2 sm:$0xff] %v149
  %s161 = scalar_lea.vmem [#allocation1], 17
  %162 = vst [vmem:[%s161] ss:$2 sm:$0xff] %v150
  %s163 = scalar_lea.vmem [#allocation1], 33
  %164 = vst [vmem:[%s163] ss:$2 sm:$0xff] %v151
  %s165 = scalar_lea.vmem [#allocation1], 49
  %166 = vst [vmem:[%s165] ss:$2 sm:$0xff] %v152
  %v167 = vld.sshfl [vmem:[#allocation1] sm:$0xff pattern:$0x75316420]
  %v168 = vld.sshfl [vmem:[#allocation1 + $0x8] sm:$0xff pattern:$0x75316420]
  %v169 = vld.sshfl [vmem:[#allocation1 + $0x10] sm:$0xff pattern:$0x75316420]
  %v170 = vld.sshfl [vmem:[#allocation1 + $0x18] sm:$0xff pattern:$0x75316420]
  %v171 = vld.sshfl [vmem:[#allocation1 + $0x20] sm:$0xff pattern:$0x75316420]
  %v172 = vld.sshfl [vmem:[#allocation1 + $0x28] sm:$0xff pattern:$0x75316420]
  %v173 = vld.sshfl [vmem:[#allocation1 + $0x30] sm:$0xff pattern:$0x75316420]
  %v174 = vld.sshfl [vmem:[#allocation1 + $0x38] sm:$0xff pattern:$0x75316420]
  %175 = vst [vmem:[%s159] ss:$2 sm:$0xff] %v153
  %v176 = vld.sshfl [vmem:[#allocation1] sm:$0xff pattern:$0x75316420]
  %177 = vrot.lane.b32.xlu0 %v167, 32
  %v178 = vpop.permute.xlu0 %177
  %179 = vrot.lane.b32.xlu0 %v168, 32
  %v180 = vpop.permute.xlu0 %179
  %181 = vrot.lane.b32.xlu0 %v169, 32
  %v182 = vpop.permute.xlu0 %181
  %183 = vrot.lane.b32.xlu0 %v170, 32
  %v184 = vpop.permute.xlu0 %183
  %185 = vrot.lane.b32.xlu0 %v171, 32
  %v186 = vpop.permute.xlu0 %185
  %187 = vrot.lane.b32.xlu0 %v172, 32
  %v188 = vpop.permute.xlu0 %187
  %189 = vrot.lane.b32.xlu0 %v173, 32
  %v190 = vpop.permute.xlu0 %189
  %191 = vrot.lane.b32.xlu0 %v174, 32
  %v192 = vpop.permute.xlu0 %191
  %193 = vrot.lane.b32.xlu0 %v176, 32
  %v194 = vpop.permute.xlu0 %193
  %vm195 = vcmask 261120
  %v196 = vsel %vm195, %v178, %v180
  %v197 = vsel %vm195, %v180, %v182
  %v198 = vsel %vm195, %v182, %v184
  %v199 = vsel %vm195, %v184, %v186
  %v200 = vsel %vm195, %v186, %v188
  %v201 = vsel %vm195, %v188, %v190
  %v202 = vsel %vm195, %v190, %v192
  %v203 = vsel %vm195, %v192, %v194
  %212 = vst [vmem:[#allocation3] sm:$0xf0] %v196
  %213 = vst [vmem:[#allocation3 + $0x8] sm:$0xf0] %v197
  %214 = vst [vmem:[#allocation3 + $0x10] sm:$0xf0] %v198
  %215 = vst [vmem:[#allocation3 + $0x18] sm:$0xf0] %v199
  %216 = vst [vmem:[#allocation3 + $0x20] sm:$0xf0] %v200
  %217 = vst [vmem:[#allocation3 + $0x28] sm:$0xf0] %v201
  %218 = vst [vmem:[#allocation3 + $0x30] sm:$0xf0] %v202
  %219 = vst [vmem:[#allocation3 + $0x38] sm:$0xf0] %v203
  %v220 = vld [vmem:[#allocation2] sm:$0xff]
  %v221 = vld [vmem:[#allocation2 + $0x8] sm:$0xff]
  %v222 = vld [vmem:[#allocation2 + $0x10] sm:$0xff]
  %v223 = vld [vmem:[#allocation2 + $0x18] sm:$0xff]
  %v224 = vld [vmem:[#allocation2 + $0x20] sm:$0xf]
  %s225 = scalar_lea.vmem %s3, 1
  %v226 = vld [vmem:[%s225] ss:$2 sm:$0xff]
  %v228 = vperm.slane %v226, 0
  %v229 = vperm.slane %v226, 1
  %v230 = vperm.slane %v226, 2
  %v231 = vperm.slane %v226, 3
  %v232 = vperm.slane %v226, 4
  %v233 = vperm.slane %v226, 5
  %v234 = vperm.slane %v226, 6
  %v235 = vperm.slane %v226, 7
  %v236 = vrot.slane %v229, 4
  %v237 = vrot.slane %v231, 4
  %v238 = vrot.slane %v233, 4
  %v239 = vrot.slane %v235, 4
  %v240 = vsel %vm49, %v228, %v236
  %v241 = vsel %vm49, %v230, %v237
  %v242 = vsel %vm49, %v232, %v238
  %v243 = vsel %vm49, %v234, %v239
  %244 = vrot.lane.b32.xlu0 %v240, 97
  %v245 = vpop.permute.xlu0 %244
  %246 = vrot.lane.b32.xlu0 %v241, 97
  %v247 = vpop.permute.xlu0 %246
  %248 = vrot.lane.b32.xlu0 %v242, 97
  %v249 = vpop.permute.xlu0 %248
  %250 = vrot.lane.b32.xlu0 %v243, 97
  %v251 = vpop.permute.xlu0 %250
  %v252 = vrot.slane %v245, 4
  %v253 = vrot.slane %v247, 4
  %v254 = vrot.slane %v249, 4
  %v255 = vrot.slane %v251, 4
  %vm256 = vcmask 793600
  %v257 = vsel %vm256, %v252, %v245
  %v258 = vsel %vm49, %v252, %v253
  %v259 = vsel %vm256, %v258, %v247
  %v260 = vsel %vm49, %v253, %v254
  %v261 = vsel %vm256, %v260, %v249
  %v262 = vsel %vm49, %v254, %v255
  %v263 = vsel %vm256, %v262, %v251
  %v269 = vmul.f32 %v220, %v257
  %v270 = vmul.f32 %v221, %v259
  %v271 = vmul.f32 %v222, %v261
  %v272 = vmul.f32 %v223, %v263
  %v273 = vmul.f32 %v224, %v255
  %279 = vst [vmem:[#allocation1] ss:$2 sm:$0xff] %v269
  %s280 = scalar_lea.vmem [#allocation1], 16
  %281 = vst [vmem:[%s280] ss:$2 sm:$0xff] %v270
  %s282 = scalar_lea.vmem [#allocation1], 32
  %283 = vst [vmem:[%s282] ss:$2 sm:$0xff] %v271
  %s284 = scalar_lea.vmem [#allocation1], 48
  %285 = vst [vmem:[%s284] ss:$2 sm:$0xff] %v272
  %v286 = vld.sshfl [vmem:[#allocation1] sm:$0xff pattern:$0x75316420]
  %v287 = vld.sshfl [vmem:[#allocation1 + $0x8] sm:$0xff pattern:$0x75316420]
  %v288 = vld.sshfl [vmem:[#allocation1 + $0x10] sm:$0xff pattern:$0x75316420]
  %v289 = vld.sshfl [vmem:[#allocation1 + $0x18] sm:$0xff pattern:$0x75316420]
  %v290 = vld.sshfl [vmem:[#allocation1 + $0x20] sm:$0xff pattern:$0x75316420]
  %v291 = vld.sshfl [vmem:[#allocation1 + $0x28] sm:$0xff pattern:$0x75316420]
  %v292 = vld.sshfl [vmem:[#allocation1 + $0x30] sm:$0xff pattern:$0x75316420]
  %v293 = vld.sshfl [vmem:[#allocation1 + $0x38] sm:$0xff pattern:$0x75316420]
  %294 = vst [vmem:[#allocation1] ss:$2 sm:$0xff] %v273
  %v295 = vld.sshfl [vmem:[#allocation1] sm:$0xff pattern:$0x75316420]
  %296 = vrot.lane.b32.xlu0 %v286, 31
  %v297 = vpop.permute.xlu0 %296
  %298 = vrot.lane.b32.xlu0 %v287, 31
  %v299 = vpop.permute.xlu0 %298
  %300 = vrot.lane.b32.xlu0 %v288, 31
  %v301 = vpop.permute.xlu0 %300
  %302 = vrot.lane.b32.xlu0 %v289, 31
  %v303 = vpop.permute.xlu0 %302
  %304 = vrot.lane.b32.xlu0 %v290, 31
  %v305 = vpop.permute.xlu0 %304
  %306 = vrot.lane.b32.xlu0 %v291, 31
  %v307 = vpop.permute.xlu0 %306
  %308 = vrot.lane.b32.xlu0 %v292, 31
  %v309 = vpop.permute.xlu0 %308
  %310 = vrot.lane.b32.xlu0 %v293, 31
  %v311 = vpop.permute.xlu0 %310
  %312 = vrot.lane.b32.xlu0 %v295, 31
  %v313 = vpop.permute.xlu0 %312
  %vm314 = vcmask 252928
  %v315 = vsel %vm314, %v297, %v299
  %v316 = vsel %vm314, %v299, %v301
  %v317 = vsel %vm314, %v301, %v303
  %v318 = vsel %vm314, %v303, %v305
  %v319 = vsel %vm314, %v305, %v307
  %v320 = vsel %vm314, %v307, %v309
  %v321 = vsel %vm314, %v309, %v311
  %v322 = vsel %vm314, %v311, %v313
  %331 = vst [vmem:[#allocation3 + $0x80] sm:$0xf] %v315
  %332 = vst [vmem:[#allocation3 + $0x88] sm:$0xf] %v316
  %333 = vst [vmem:[#allocation3 + $0x90] sm:$0xf] %v317
  %334 = vst [vmem:[#allocation3 + $0x98] sm:$0xf] %v318
  %335 = vst [vmem:[#allocation3 + $0xa0] sm:$0xf] %v319
  %336 = vst [vmem:[#allocation3 + $0xa8] sm:$0xf] %v320
  %337 = vst [vmem:[#allocation3 + $0xb0] sm:$0xf] %v321
  %338 = vst [vmem:[#allocation3 + $0xb8] sm:$0xf] %v322
  %v339 = vld [vmem:[#allocation2] sm:$0xff]
  %v340 = vld [vmem:[#allocation2 + $0x8] sm:$0xff]
  %v341 = vld [vmem:[#allocation2 + $0x10] sm:$0xff]
  %v342 = vld [vmem:[#allocation2 + $0x18] sm:$0xff]
  %v343 = vld [vmem:[#allocation2 + $0x20] sm:$0xf]
  %v344 = vld [vmem:[%s3] ss:$2 sm:$0xff]
  %v346 = vperm.slane %v344, 0
  %v347 = vperm.slane %v344, 1
  %v348 = vperm.slane %v344, 2
  %v349 = vperm.slane %v344, 3
  %v350 = vperm.slane %v344, 4
  %v351 = vperm.slane %v344, 5
  %v352 = vperm.slane %v344, 6
  %v353 = vperm.slane %v344, 7
  %v354 = vrot.slane %v347, 4
  %v355 = vrot.slane %v349, 4
  %v356 = vrot.slane %v351, 4
  %v357 = vrot.slane %v353, 4
  %v358 = vsel %vm49, %v346, %v354
  %v359 = vsel %vm49, %v348, %v355
  %v360 = vsel %vm49, %v350, %v356
  %v361 = vsel %vm49, %v352, %v357
  %362 = vrot.lane.b32.xlu0 %v358, 127
  %v363 = vpop.permute.xlu0 %362
  %364 = vrot.lane.b32.xlu0 %v359, 127
  %v365 = vpop.permute.xlu0 %364
  %366 = vrot.lane.b32.xlu0 %v360, 127
  %v367 = vpop.permute.xlu0 %366
  %368 = vrot.lane.b32.xlu0 %v361, 127
  %v369 = vpop.permute.xlu0 %368
  %v370 = vrot.slane %v363, 4
  %v371 = vrot.slane %v365, 4
  %v372 = vrot.slane %v367, 4
  %v373 = vrot.slane %v369, 4
  %vm374 = vcmask 1039360
  %v375 = vsel %vm374, %v370, %v363
  %v376 = vsel %vm49, %v370, %v371
  %v377 = vsel %vm374, %v376, %v365
  %v378 = vsel %vm49, %v371, %v372
  %v379 = vsel %vm374, %v378, %v367
  %v380 = vsel %vm49, %v372, %v373
  %v381 = vsel %vm374, %v380, %v369
  %v387 = vmul.f32 %v339, %v375
  %v388 = vmul.f32 %v340, %v377
  %v389 = vmul.f32 %v341, %v379
  %v390 = vmul.f32 %v342, %v381
  %v391 = vmul.f32 %v343, %v373
  %s397 = scalar_lea.vmem [#allocation1], 1
  %398 = vst [vmem:[%s397] ss:$2 sm:$0xff] %v387
  %s399 = scalar_lea.vmem [#allocation1], 17
  %400 = vst [vmem:[%s399] ss:$2 sm:$0xff] %v388
  %s401 = scalar_lea.vmem [#allocation1], 33
  %402 = vst [vmem:[%s401] ss:$2 sm:$0xff] %v389
  %s403 = scalar_lea.vmem [#allocation1], 49
  %404 = vst [vmem:[%s403] ss:$2 sm:$0xff] %v390
  %v405 = vld.sshfl [vmem:[#allocation1] sm:$0xff pattern:$0x75316420]
  %v406 = vld.sshfl [vmem:[#allocation1 + $0x8] sm:$0xff pattern:$0x75316420]
  %v407 = vld.sshfl [vmem:[#allocation1 + $0x10] sm:$0xff pattern:$0x75316420]
  %v408 = vld.sshfl [vmem:[#allocation1 + $0x18] sm:$0xff pattern:$0x75316420]
  %v409 = vld.sshfl [vmem:[#allocation1 + $0x20] sm:$0xff pattern:$0x75316420]
  %v410 = vld.sshfl [vmem:[#allocation1 + $0x28] sm:$0xff pattern:$0x75316420]
  %v411 = vld.sshfl [vmem:[#allocation1 + $0x30] sm:$0xff pattern:$0x75316420]
  %v412 = vld.sshfl [vmem:[#allocation1 + $0x38] sm:$0xff pattern:$0x75316420]
  %413 = vst [vmem:[%s397] ss:$2 sm:$0xff] %v391
  %v414 = vld.sshfl [vmem:[#allocation1] sm:$0xff pattern:$0x75316420]
  %415 = vrot.lane.b32.xlu0 %v405, 1
  %v416 = vpop.permute.xlu0 %415
  %417 = vrot.lane.b32.xlu0 %v406, 1
  %v418 = vpop.permute.xlu0 %417
  %419 = vrot.lane.b32.xlu0 %v407, 1
  %v420 = vpop.permute.xlu0 %419
  %421 = vrot.lane.b32.xlu0 %v408, 1
  %v422 = vpop.permute.xlu0 %421
  %423 = vrot.lane.b32.xlu0 %v409, 1
  %v424 = vpop.permute.xlu0 %423
  %425 = vrot.lane.b32.xlu0 %v410, 1
  %v426 = vpop.permute.xlu0 %425
  %427 = vrot.lane.b32.xlu0 %v411, 1
  %v428 = vpop.permute.xlu0 %427
  %429 = vrot.lane.b32.xlu0 %v412, 1
  %v430 = vpop.permute.xlu0 %429
  %431 = vrot.lane.b32.xlu0 %v414, 1
  %v432 = vpop.permute.xlu0 %431
  %vm433 = vcmask 7168
  %v434 = vsel %vm433, %v416, %v418
  %v435 = vsel %vm433, %v418, %v420
  %v436 = vsel %vm433, %v420, %v422
  %v437 = vsel %vm433, %v422, %v424
  %v438 = vsel %vm433, %v424, %v426
  %v439 = vsel %vm433, %v426, %v428
  %v440 = vsel %vm433, %v428, %v430
  %v441 = vsel %vm433, %v430, %v432
  %450 = vst [vmem:[#allocation3 + $0x80] sm:$0xf0] %v434
  %451 = vst [vmem:[#allocation3 + $0x88] sm:$0xf0] %v435
  %452 = vst [vmem:[#allocation3 + $0x90] sm:$0xf0] %v436
  %453 = vst [vmem:[#allocation3 + $0x98] sm:$0xf0] %v437
  %454 = vst [vmem:[#allocation3 + $0xa0] sm:$0xf0] %v438
  %455 = vst [vmem:[#allocation3 + $0xa8] sm:$0xf0] %v439
  %456 = vst [vmem:[#allocation3 + $0xb0] sm:$0xf0] %v440
  %457 = vst [vmem:[#allocation3 + $0xb8] sm:$0xf0] %v441
  %v458 = vld [vmem:[#allocation2 + $0x4] sm:$0xff]
  %v459 = vld [vmem:[#allocation2 + $0xc] sm:$0xff]
  %v460 = vld [vmem:[#allocation2 + $0x14] sm:$0xff]
  %v461 = vld [vmem:[#allocation2 + $0x1c] sm:$0xff]
  %466 = vst [vmem:[#allocation1] ss:$2 sm:$0xff] %v458
  %s467 = scalar_lea.vmem [#allocation1], 16
  %468 = vst [vmem:[%s467] ss:$2 sm:$0xff] %v459
  %s469 = scalar_lea.vmem [#allocation1], 32
  %470 = vst [vmem:[%s469] ss:$2 sm:$0xff] %v460
  %s471 = scalar_lea.vmem [#allocation1], 48
  %472 = vst [vmem:[%s471] ss:$2 sm:$0xff] %v461
  %v473 = vld.sshfl [vmem:[#allocation1] sm:$0xff pattern:$0x75316420]
  %v474 = vld.sshfl [vmem:[#allocation1 + $0x8] sm:$0xff pattern:$0x75316420]
  %v475 = vld.sshfl [vmem:[#allocation1 + $0x10] sm:$0xff pattern:$0x75316420]
  %v476 = vld.sshfl [vmem:[#allocation1 + $0x18] sm:$0xff pattern:$0x75316420]
  %v477 = vld.sshfl [vmem:[#allocation1 + $0x20] sm:$0xff pattern:$0x75316420]
  %v478 = vld.sshfl [vmem:[#allocation1 + $0x28] sm:$0xff pattern:$0x75316420]
  %v479 = vld.sshfl [vmem:[#allocation1 + $0x30] sm:$0xff pattern:$0x75316420]
  %v480 = vld.sshfl [vmem:[#allocation1 + $0x38] sm:$0xff pattern:$0x75316420]
  %489 = vst [vmem:[#allocation3 + $0x100] sm:$0xf] %v473
  %490 = vst [vmem:[#allocation3 + $0x108] sm:$0xf] %v474
  %491 = vst [vmem:[#allocation3 + $0x110] sm:$0xf] %v475
  %492 = vst [vmem:[#allocation3 + $0x118] sm:$0xf] %v476
  %493 = vst [vmem:[#allocation3 + $0x120] sm:$0xf] %v477
  %494 = vst [vmem:[#allocation3 + $0x128] sm:$0xf] %v478
  %495 = vst [vmem:[#allocation3 + $0x130] sm:$0xf] %v479
  %496 = vst [vmem:[#allocation3 + $0x138] sm:$0xf] %v480
  %v497 = vld [vmem:[#allocation2 + $0x4] sm:$0xff]
  %v498 = vld [vmem:[#allocation2 + $0xc] sm:$0xff]
  %v499 = vld [vmem:[#allocation2 + $0x14] sm:$0xff]
  %v500 = vld [vmem:[#allocation2 + $0x1c] sm:$0xff]
  %v501 = vld [vmem:[#allocation2 + $0x24] sm:$0xf]
  %v502 = vld [vmem:[%s225] ss:$2 sm:$0xff]
  %v504 = vperm.slane %v502, 0
  %v505 = vperm.slane %v502, 1
  %v506 = vperm.slane %v502, 2
  %v507 = vperm.slane %v502, 3
  %v508 = vperm.slane %v502, 4
  %v509 = vperm.slane %v502, 5
  %v510 = vperm.slane %v502, 6
  %v511 = vperm.slane %v502, 7
  %v512 = vrot.slane %v505, 4
  %v513 = vrot.slane %v507, 4
  %v514 = vrot.slane %v509, 4
  %v515 = vrot.slane %v511, 4
  %v516 = vsel %vm49, %v504, %v512
  %v517 = vsel %vm49, %v506, %v513
  %v518 = vsel %vm49, %v508, %v514
  %v519 = vsel %vm49, %v510, %v515
  %520 = vrot.lane.b32.xlu0 %v516, 1
  %v521 = vpop.permute.xlu0 %520
  %522 = vrot.lane.b32.xlu0 %v517, 1
  %v523 = vpop.permute.xlu0 %522
  %524 = vrot.lane.b32.xlu0 %v518, 1
  %v525 = vpop.permute.xlu0 %524
  %526 = vrot.lane.b32.xlu0 %v519, 1
  %v527 = vpop.permute.xlu0 %526
  %v528 = vrot.slane %v521, 4
  %v529 = vrot.slane %v523, 4
  %v530 = vrot.slane %v525, 4
  %v531 = vrot.slane %v527, 4
  %v532 = vsel %vm433, %v528, %v521
  %v533 = vsel %vm49, %v528, %v529
  %v534 = vsel %vm433, %v533, %v523
  %v535 = vsel %vm49, %v529, %v530
  %v536 = vsel %vm433, %v535, %v525
  %v537 = vsel %vm49, %v530, %v531
  %v538 = vsel %vm433, %v537, %v527
  %v544 = vmul.f32 %v497, %v532
  %v545 = vmul.f32 %v498, %v534
  %v546 = vmul.f32 %v499, %v536
  %v547 = vmul.f32 %v500, %v538
  %v548 = vmul.f32 %v501, %v531
  %s554 = scalar_lea.vmem [#allocation1], 1
  %555 = vst [vmem:[%s554] ss:$2 sm:$0xff] %v544
  %s556 = scalar_lea.vmem [#allocation1], 17
  %557 = vst [vmem:[%s556] ss:$2 sm:$0xff] %v545
  %s558 = scalar_lea.vmem [#allocation1], 33
  %559 = vst [vmem:[%s558] ss:$2 sm:$0xff] %v546
  %s560 = scalar_lea.vmem [#allocation1], 49
  %561 = vst [vmem:[%s560] ss:$2 sm:$0xff] %v547
  %v562 = vld.sshfl [vmem:[#allocation1] sm:$0xff pattern:$0x75316420]
  %v563 = vld.sshfl [vmem:[#allocation1 + $0x8] sm:$0xff pattern:$0x75316420]
  %v564 = vld.sshfl [vmem:[#allocation1 + $0x10] sm:$0xff pattern:$0x75316420]
  %v565 = vld.sshfl [vmem:[#allocation1 + $0x18] sm:$0xff pattern:$0x75316420]
  %v566 = vld.sshfl [vmem:[#allocation1 + $0x20] sm:$0xff pattern:$0x75316420]
  %v567 = vld.sshfl [vmem:[#allocation1 + $0x28] sm:$0xff pattern:$0x75316420]
  %v568 = vld.sshfl [vmem:[#allocation1 + $0x30] sm:$0xff pattern:$0x75316420]
  %v569 = vld.sshfl [vmem:[#allocation1 + $0x38] sm:$0xff pattern:$0x75316420]
  %570 = vst [vmem:[%s554] ss:$2 sm:$0xff] %v548
  %v571 = vld.sshfl [vmem:[#allocation1] sm:$0xff pattern:$0x75316420]
  %572 = vrot.lane.b32.xlu0 %v562, 127
  %v573 = vpop.permute.xlu0 %572
  %574 = vrot.lane.b32.xlu0 %v563, 127
  %v575 = vpop.permute.xlu0 %574
  %576 = vrot.lane.b32.xlu0 %v564, 127
  %v577 = vpop.permute.xlu0 %576
  %578 = vrot.lane.b32.xlu0 %v565, 127
  %v579 = vpop.permute.xlu0 %578
  %580 = vrot.lane.b32.xlu0 %v566, 127
  %v581 = vpop.permute.xlu0 %580
  %582 = vrot.lane.b32.xlu0 %v567, 127
  %v583 = vpop.permute.xlu0 %582
  %584 = vrot.lane.b32.xlu0 %v568, 127
  %v585 = vpop.permute.xlu0 %584
  %586 = vrot.lane.b32.xlu0 %v569, 127
  %v587 = vpop.permute.xlu0 %586
  %588 = vrot.lane.b32.xlu0 %v571, 127
  %v589 = vpop.permute.xlu0 %588
  %v590 = vsel %vm374, %v573, %v575
  %v591 = vsel %vm374, %v575, %v577
  %v592 = vsel %vm374, %v577, %v579
  %v593 = vsel %vm374, %v579, %v581
  %v594 = vsel %vm374, %v581, %v583
  %v595 = vsel %vm374, %v583, %v585
  %v596 = vsel %vm374, %v585, %v587
  %v597 = vsel %vm374, %v587, %v589
  %606 = vst [vmem:[#allocation3 + $0x100] sm:$0xf0] %v590
  %607 = vst [vmem:[#allocation3 + $0x108] sm:$0xf0] %v591
  %608 = vst [vmem:[#allocation3 + $0x110] sm:$0xf0] %v592
  %609 = vst [vmem:[#allocation3 + $0x118] sm:$0xf0] %v593
  %610 = vst [vmem:[#allocation3 + $0x120] sm:$0xf0] %v594
  %611 = vst [vmem:[#allocation3 + $0x128] sm:$0xf0] %v595
  %612 = vst [vmem:[#allocation3 + $0x130] sm:$0xf0] %v596
  %613 = vst [vmem:[#allocation3 + $0x138] sm:$0xf0] %v597
  %v614 = vld [vmem:[#allocation2 + $0x4] sm:$0xff]
  %v615 = vld [vmem:[#allocation2 + $0xc] sm:$0xff]
  %v616 = vld [vmem:[#allocation2 + $0x14] sm:$0xff]
  %v617 = vld [vmem:[#allocation2 + $0x1c] sm:$0xff]
  %v618 = vld [vmem:[#allocation2 + $0x24] sm:$0xf]
  %v619 = vld [vmem:[%s3] ss:$2 sm:$0xff]
  %v621 = vperm.slane %v619, 0
  %v622 = vperm.slane %v619, 1
  %v623 = vperm.slane %v619, 2
  %v624 = vperm.slane %v619, 3
  %v625 = vperm.slane %v619, 4
  %v626 = vperm.slane %v619, 5
  %v627 = vperm.slane %v619, 6
  %v628 = vperm.slane %v619, 7
  %v629 = vrot.slane %v622, 4
  %v630 = vrot.slane %v624, 4
  %v631 = vrot.slane %v626, 4
  %v632 = vrot.slane %v628, 4
  %v633 = vsel %vm49, %v621, %v629
  %v634 = vsel %vm49, %v623, %v630
  %v635 = vsel %vm49, %v625, %v631
  %v636 = vsel %vm49, %v627, %v632
  %637 = vrot.lane.b32.xlu0 %v633, 31
  %v638 = vpop.permute.xlu0 %637
  %639 = vrot.lane.b32.xlu0 %v634, 31
  %v640 = vpop.permute.xlu0 %639
  %641 = vrot.lane.b32.xlu0 %v635, 31
  %v642 = vpop.permute.xlu0 %641
  %643 = vrot.lane.b32.xlu0 %v636, 31
  %v644 = vpop.permute.xlu0 %643
  %v645 = vrot.slane %v638, 4
  %v646 = vrot.slane %v640, 4
  %v647 = vrot.slane %v642, 4
  %v648 = vrot.slane %v644, 4
  %v649 = vsel %vm314, %v645, %v638
  %v650 = vsel %vm49, %v645, %v646
  %v651 = vsel %vm314, %v650, %v640
  %v652 = vsel %vm49, %v646, %v647
  %v653 = vsel %vm314, %v652, %v642
  %v654 = vsel %vm49, %v647, %v648
  %v655 = vsel %vm314, %v654, %v644
  %v661 = vmul.f32 %v614, %v649
  %v662 = vmul.f32 %v615, %v651
  %v663 = vmul.f32 %v616, %v653
  %v664 = vmul.f32 %v617, %v655
  %v665 = vmul.f32 %v618, %v648
  %671 = vst [vmem:[#allocation1] ss:$2 sm:$0xff] %v661
  %s672 = scalar_lea.vmem [#allocation1], 16
  %673 = vst [vmem:[%s672] ss:$2 sm:$0xff] %v662
  %s674 = scalar_lea.vmem [#allocation1], 32
  %675 = vst [vmem:[%s674] ss:$2 sm:$0xff] %v663
  %s676 = scalar_lea.vmem [#allocation1], 48
  %677 = vst [vmem:[%s676] ss:$2 sm:$0xff] %v664
  %v678 = vld.sshfl [vmem:[#allocation1] sm:$0xff pattern:$0x75316420]
  %v679 = vld.sshfl [vmem:[#allocation1 + $0x8] sm:$0xff pattern:$0x75316420]
  %v680 = vld.sshfl [vmem:[#allocation1 + $0x10] sm:$0xff pattern:$0x75316420]
  %v681 = vld.sshfl [vmem:[#allocation1 + $0x18] sm:$0xff pattern:$0x75316420]
  %v682 = vld.sshfl [vmem:[#allocation1 + $0x20] sm:$0xff pattern:$0x75316420]
  %v683 = vld.sshfl [vmem:[#allocation1 + $0x28] sm:$0xff pattern:$0x75316420]
  %v684 = vld.sshfl [vmem:[#allocation1 + $0x30] sm:$0xff pattern:$0x75316420]
  %v685 = vld.sshfl [vmem:[#allocation1 + $0x38] sm:$0xff pattern:$0x75316420]
  %686 = vst [vmem:[#allocation1] ss:$2 sm:$0xff] %v665
  %v687 = vld.sshfl [vmem:[#allocation1] sm:$0xff pattern:$0x75316420]
  %688 = vrot.lane.b32.xlu0 %v678, 97
  %v689 = vpop.permute.xlu0 %688
  %690 = vrot.lane.b32.xlu0 %v679, 97
  %v691 = vpop.permute.xlu0 %690
  %692 = vrot.lane.b32.xlu0 %v680, 97
  %v693 = vpop.permute.xlu0 %692
  %694 = vrot.lane.b32.xlu0 %v681, 97
  %v695 = vpop.permute.xlu0 %694
  %696 = vrot.lane.b32.xlu0 %v682, 97
  %v697 = vpop.permute.xlu0 %696
  %698 = vrot.lane.b32.xlu0 %v683, 97
  %v699 = vpop.permute.xlu0 %698
  %700 = vrot.lane.b32.xlu0 %v684, 97
  %v701 = vpop.permute.xlu0 %700
  %702 = vrot.lane.b32.xlu0 %v685, 97
  %v703 = vpop.permute.xlu0 %702
  %704 = vrot.lane.b32.xlu0 %v687, 97
  %v705 = vpop.permute.xlu0 %704
  %v706 = vsel %vm256, %v689, %v691
  %v707 = vsel %vm256, %v691, %v693
  %v708 = vsel %vm256, %v693, %v695
  %v709 = vsel %vm256, %v695, %v697
  %v710 = vsel %vm256, %v697, %v699
  %v711 = vsel %vm256, %v699, %v701
  %v712 = vsel %vm256, %v701, %v703
  %v713 = vsel %vm256, %v703, %v705
  %722 = vst [vmem:[#allocation3 + $0x180] sm:$0xf] %v706
  %723 = vst [vmem:[#allocation3 + $0x188] sm:$0xf] %v707
  %724 = vst [vmem:[#allocation3 + $0x190] sm:$0xf] %v708
  %725 = vst [vmem:[#allocation3 + $0x198] sm:$0xf] %v709
  %726 = vst [vmem:[#allocation3 + $0x1a0] sm:$0xf] %v710
  %727 = vst [vmem:[#allocation3 + $0x1a8] sm:$0xf] %v711
  %728 = vst [vmem:[#allocation3 + $0x1b0] sm:$0xf] %v712
  %729 = vst [vmem:[#allocation3 + $0x1b8] sm:$0xf] %v713
  %v730 = vld [vmem:[#allocation2 + $0x4] sm:$0xff]
  %v731 = vld [vmem:[#allocation2 + $0xc] sm:$0xff]
  %v732 = vld [vmem:[#allocation2 + $0x14] sm:$0xff]
  %v733 = vld [vmem:[#allocation2 + $0x1c] sm:$0xff]
  %v734 = vld [vmem:[#allocation2 + $0x24] sm:$0xf]
  %s740 = scalar_lea.vmem [#allocation1], 1
  %741 = vst [vmem:[%s740] ss:$2 sm:$0xff] %v730
  %s742 = scalar_lea.vmem [#allocation1], 17
  %743 = vst [vmem:[%s742] ss:$2 sm:$0xff] %v731
  %s744 = scalar_lea.vmem [#allocation1], 33
  %745 = vst [vmem:[%s744] ss:$2 sm:$0xff] %v732
  %s746 = scalar_lea.vmem [#allocation1], 49
  %747 = vst [vmem:[%s746] ss:$2 sm:$0xff] %v733
  %v748 = vld.sshfl [vmem:[#allocation1] sm:$0xff pattern:$0x75316420]
  %v749 = vld.sshfl [vmem:[#allocation1 + $0x8] sm:$0xff pattern:$0x75316420]
  %v750 = vld.sshfl [vmem:[#allocation1 + $0x10] sm:$0xff pattern:$0x75316420]
  %v751 = vld.sshfl [vmem:[#allocation1 + $0x18] sm:$0xff pattern:$0x75316420]
  %v752 = vld.sshfl [vmem:[#allocation1 + $0x20] sm:$0xff pattern:$0x75316420]
  %v753 = vld.sshfl [vmem:[#allocation1 + $0x28] sm:$0xff pattern:$0x75316420]
  %v754 = vld.sshfl [vmem:[#allocation1 + $0x30] sm:$0xff pattern:$0x75316420]
  %v755 = vld.sshfl [vmem:[#allocation1 + $0x38] sm:$0xff pattern:$0x75316420]
  %756 = vst [vmem:[%s740] ss:$2 sm:$0xff] %v734
  %v757 = vld.sshfl [vmem:[#allocation1] sm:$0xff pattern:$0x75316420]
  %758 = vrot.lane.b32.xlu0 %v748, 96
  %v759 = vpop.permute.xlu0 %758
  %760 = vrot.lane.b32.xlu0 %v749, 96
  %v761 = vpop.permute.xlu0 %760
  %762 = vrot.lane.b32.xlu0 %v750, 96
  %v763 = vpop.permute.xlu0 %762
  %764 = vrot.lane.b32.xlu0 %v751, 96
  %v765 = vpop.permute.xlu0 %764
  %766 = vrot.lane.b32.xlu0 %v752, 96
  %v767 = vpop.permute.xlu0 %766
  %768 = vrot.lane.b32.xlu0 %v753, 96
  %v769 = vpop.permute.xlu0 %768
  %770 = vrot.lane.b32.xlu0 %v754, 96
  %v771 = vpop.permute.xlu0 %770
  %772 = vrot.lane.b32.xlu0 %v755, 96
  %v773 = vpop.permute.xlu0 %772
  %774 = vrot.lane.b32.xlu0 %v757, 96
  %v775 = vpop.permute.xlu0 %774
  %vm776 = vcmask 785408
  %v777 = vsel %vm776, %v759, %v761
  %v778 = vsel %vm776, %v761, %v763
  %v779 = vsel %vm776, %v763, %v765
  %v780 = vsel %vm776, %v765, %v767
  %v781 = vsel %vm776, %v767, %v769
  %v782 = vsel %vm776, %v769, %v771
  %v783 = vsel %vm776, %v771, %v773
  %v784 = vsel %vm776, %v773, %v775
  %793 = vst [vmem:[#allocation3 + $0x180] sm:$0xf0] %v777
  %794 = vst [vmem:[#allocation3 + $0x188] sm:$0xf0] %v778
  %795 = vst [vmem:[#allocation3 + $0x190] sm:$0xf0] %v779
  %796 = vst [vmem:[#allocation3 + $0x198] sm:$0xf0] %v780
  %797 = vst [vmem:[#allocation3 + $0x1a0] sm:$0xf0] %v781
  %798 = vst [vmem:[#allocation3 + $0x1a8] sm:$0xf0] %v782
  %799 = vst [vmem:[#allocation3 + $0x1b0] sm:$0xf0] %v783
  %800 = vst [vmem:[#allocation3 + $0x1b8] sm:$0xf0] %v784
  %v801 = vld [vmem:[#allocation2 + $0x4] sm:$0xff]
  %v802 = vld [vmem:[#allocation2 + $0xc] sm:$0xff]
  %v803 = vld [vmem:[#allocation2 + $0x14] sm:$0xff]
  %v804 = vld [vmem:[#allocation2 + $0x1c] sm:$0xff]
  %v805 = vld [vmem:[#allocation2 + $0x24] sm:$0xf]
  %v806 = vld [vmem:[%s225] ss:$2 sm:$0xff]
  %v808 = vperm.slane %v806, 0
  %v809 = vperm.slane %v806, 1
  %v810 = vperm.slane %v806, 2
  %v811 = vperm.slane %v806, 3
  %v812 = vperm.slane %v806, 4
  %v813 = vperm.slane %v806, 5
  %v814 = vperm.slane %v806, 6
  %v815 = vperm.slane %v806, 7
  %v816 = vrot.slane %v809, 4
  %v817 = vrot.slane %v811, 4
  %v818 = vrot.slane %v813, 4
  %v819 = vrot.slane %v815, 4
  %v820 = vsel %vm49, %v808, %v816
  %v821 = vsel %vm49, %v810, %v817
  %v822 = vsel %vm49, %v812, %v818
  %v823 = vsel %vm49, %v814, %v819
  %824 = vrot.lane.b32.xlu0 %v820, 33
  %v825 = vpop.permute.xlu0 %824
  %826 = vrot.lane.b32.xlu0 %v821, 33
  %v827 = vpop.permute.xlu0 %826
  %828 = vrot.lane.b32.xlu0 %v822, 33
  %v829 = vpop.permute.xlu0 %828
  %830 = vrot.lane.b32.xlu0 %v823, 33
  %v831 = vpop.permute.xlu0 %830
  %v832 = vrot.slane %v825, 4
  %v833 = vrot.slane %v827, 4
  %v834 = vrot.slane %v829, 4
  %v835 = vrot.slane %v831, 4
  %v836 = vsel %vm124, %v832, %v825
  %v837 = vsel %vm49, %v832, %v833
  %v838 = vsel %vm124, %v837, %v827
  %v839 = vsel %vm49, %v833, %v834
  %v840 = vsel %vm124, %v839, %v829
  %v841 = vsel %vm49, %v834, %v835
  %v842 = vsel %vm124, %v841, %v831
  %v848 = vmul.f32 %v801, %v836
  %v849 = vmul.f32 %v802, %v838
  %v850 = vmul.f32 %v803, %v840
  %v851 = vmul.f32 %v804, %v842
  %v852 = vmul.f32 %v805, %v835
  %858 = vst [vmem:[#allocation1] ss:$2 sm:$0xff] %v848
  %s859 = scalar_lea.vmem [#allocation1], 16
  %860 = vst [vmem:[%s859] ss:$2 sm:$0xff] %v849
  %s861 = scalar_lea.vmem [#allocation1], 32
  %862 = vst [vmem:[%s861] ss:$2 sm:$0xff] %v850
  %s863 = scalar_lea.vmem [#allocation1], 48
  %864 = vst [vmem:[%s863] ss:$2 sm:$0xff] %v851
  %v865 = vld.sshfl [vmem:[#allocation1] sm:$0xff pattern:$0x75316420]
  %v866 = vld.sshfl [vmem:[#allocation1 + $0x8] sm:$0xff pattern:$0x75316420]
  %v867 = vld.sshfl [vmem:[#allocation1 + $0x10] sm:$0xff pattern:$0x75316420]
  %v868 = vld.sshfl [vmem:[#allocation1 + $0x18] sm:$0xff pattern:$0x75316420]
  %v869 = vld.sshfl [vmem:[#allocation1 + $0x20] sm:$0xff pattern:$0x75316420]
  %v870 = vld.sshfl [vmem:[#allocation1 + $0x28] sm:$0xff pattern:$0x75316420]
  %v871 = vld.sshfl [vmem:[#allocation1 + $0x30] sm:$0xff pattern:$0x75316420]
  %v872 = vld.sshfl [vmem:[#allocation1 + $0x38] sm:$0xff pattern:$0x75316420]
  %873 = vst [vmem:[#allocation1] ss:$2 sm:$0xff] %v852
  %v874 = vld.sshfl [vmem:[#allocation1] sm:$0xff pattern:$0x75316420]
  %875 = vrot.lane.b32.xlu0 %v865, 95
  %v876 = vpop.permute.xlu0 %875
  %877 = vrot.lane.b32.xlu0 %v866, 95
  %v878 = vpop.permute.xlu0 %877
  %879 = vrot.lane.b32.xlu0 %v867, 95
  %v880 = vpop.permute.xlu0 %879
  %881 = vrot.lane.b32.xlu0 %v868, 95
  %v882 = vpop.permute.xlu0 %881
  %883 = vrot.lane.b32.xlu0 %v869, 95
  %v884 = vpop.permute.xlu0 %883
  %885 = vrot.lane.b32.xlu0 %v870, 95
  %v886 = vpop.permute.xlu0 %885
  %887 = vrot.lane.b32.xlu0 %v871, 95
  %v888 = vpop.permute.xlu0 %887
  %889 = vrot.lane.b32.xlu0 %v872, 95
  %v890 = vpop.permute.xlu0 %889
  %891 = vrot.lane.b32.xlu0 %v874, 95
  %v892 = vpop.permute.xlu0 %891
  %v893 = vsel %vm66, %v876, %v878
  %v894 = vsel %vm66, %v878, %v880
  %v895 = vsel %vm66, %v880, %v882
  %v896 = vsel %vm66, %v882, %v884
  %v897 = vsel %vm66, %v884, %v886
  %v898 = vsel %vm66, %v886, %v888
  %v899 = vsel %vm66, %v888, %v890
  %v900 = vsel %vm66, %v890, %v892
  %909 = vst [vmem:[#allocation3 + $0x200] sm:$0xf] %v893
  %910 = vst [vmem:[#allocation3 + $0x208] sm:$0xf] %v894
  %911 = vst [vmem:[#allocation3 + $0x210] sm:$0xf] %v895
  %912 = vst [vmem:[#allocation3 + $0x218] sm:$0xf] %v896
  %913 = vst [vmem:[#allocation3 + $0x220] sm:$0xf] %v897
  %914 = vst [vmem:[#allocation3 + $0x228] sm:$0xf] %v898
  %915 = vst [vmem:[#allocation3 + $0x230] sm:$0xf] %v899
  %916 = vst [vmem:[#allocation3 + $0x238] sm:$0xf] %v900
  %s917 = scalar_lea.vmem %s0, 32
  %v918 = vld [vmem:[%s917] sm:$0xff]
  %v919 = vld [vmem:[%s917 + $0x8] sm:$0xff]
  %v920 = vld [vmem:[%s917 + $0x10] sm:$0xff]
  %v921 = vld [vmem:[%s917 + $0x18] sm:$0xff]
  %922 = vst [vmem:[#allocation2 + $0x4] sm:$0xff] %v918
  %923 = vst [vmem:[#allocation2 + $0xc] sm:$0xff] %v919
  %924 = vst [vmem:[#allocation2 + $0x14] sm:$0xff] %v920
  %925 = vst [vmem:[#allocation2 + $0x1c] sm:$0xff] %v921
  %v926 = vld [vmem:[#allocation2] sm:$0xff]
  %v927 = vld [vmem:[#allocation2 + $0x8] sm:$0xff]
  %v928 = vld [vmem:[#allocation2 + $0x10] sm:$0xff]
  %v929 = vld [vmem:[#allocation2 + $0x18] sm:$0xff]
  %v930 = vld [vmem:[#allocation2 + $0x20] sm:$0xf]
  %v931 = vld [vmem:[%s3] ss:$2 sm:$0xff]
  %v933 = vperm.slane %v931, 0
  %v934 = vperm.slane %v931, 1
  %v935 = vperm.slane %v931, 2
  %v936 = vperm.slane %v931, 3
  %v937 = vperm.slane %v931, 4
  %v938 = vperm.slane %v931, 5
  %v939 = vperm.slane %v931, 6
  %v940 = vperm.slane %v931, 7
  %v941 = vrot.slane %v934, 4
  %v942 = vrot.slane %v936, 4
  %v943 = vrot.slane %v938, 4
  %v944 = vrot.slane %v940, 4
  %v945 = vsel %vm49, %v933, %v941
  %v946 = vsel %vm49, %v935, %v942
  %v947 = vsel %vm49, %v937, %v943
  %v948 = vsel %vm49, %v939, %v944
  %949 = vrot.lane.b32.xlu0 %v945, 95
  %v950 = vpop.permute.xlu0 %949
  %951 = vrot.lane.b32.xlu0 %v946, 95
  %v952 = vpop.permute.xlu0 %951
  %953 = vrot.lane.b32.xlu0 %v947, 95
  %v954 = vpop.permute.xlu0 %953
  %955 = vrot.lane.b32.xlu0 %v948, 95
  %v956 = vpop.permute.xlu0 %955
  %v957 = vrot.slane %v950, 4
  %v958 = vrot.slane %v952, 4
  %v959 = vrot.slane %v954, 4
  %v960 = vrot.slane %v956, 4
  %v961 = vsel %vm66, %v957, %v950
  %v962 = vsel %vm49, %v957, %v958
  %v963 = vsel %vm66, %v962, %v952
  %v964 = vsel %vm49, %v958, %v959
  %v965 = vsel %vm66, %v964, %v954
  %v966 = vsel %vm49, %v959, %v960
  %v967 = vsel %vm66, %v966, %v956
  %v973 = vmul.f32 %v926, %v961
  %v974 = vmul.f32 %v927, %v963
  %v975 = vmul.f32 %v928, %v965
  %v976 = vmul.f32 %v929, %v967
  %v977 = vmul.f32 %v930, %v960
  %983 = vst [vmem:[#allocation1] ss:$2 sm:$0xff] %v973
  %s984 = scalar_lea.vmem [#allocation1], 16
  %985 = vst [vmem:[%s984] ss:$2 sm:$0xff] %v974
  %s986 = scalar_lea.vmem [#allocation1], 32
  %987 = vst [vmem:[%s986] ss:$2 sm:$0xff] %v975
  %s988 = scalar_lea.vmem [#allocation1], 48
  %989 = vst [vmem:[%s988] ss:$2 sm:$0xff] %v976
  %v990 = vld.sshfl [vmem:[#allocation1] sm:$0xff pattern:$0x75316420]
  %v991 = vld.sshfl [vmem:[#allocation1 + $0x8] sm:$0xff pattern:$0x75316420]
  %v992 = vld.sshfl [vmem:[#allocation1 + $0x10] sm:$0xff pattern:$0x75316420]
  %v993 = vld.sshfl [vmem:[#allocation1 + $0x18] sm:$0xff pattern:$0x75316420]
  %v994 = vld.sshfl [vmem:[#allocation1 + $0x20] sm:$0xff pattern:$0x75316420]
  %v995 = vld.sshfl [vmem:[#allocation1 + $0x28] sm:$0xff pattern:$0x75316420]
  %v996 = vld.sshfl [vmem:[#allocation1 + $0x30] sm:$0xff pattern:$0x75316420]
  %v997 = vld.sshfl [vmem:[#allocation1 + $0x38] sm:$0xff pattern:$0x75316420]
  %998 = vst [vmem:[#allocation1] ss:$2 sm:$0xff] %v977
  %v999 = vld.sshfl [vmem:[#allocation1] sm:$0xff pattern:$0x75316420]
  %1000 = vrot.lane.b32.xlu0 %v990, 33
  %v1001 = vpop.permute.xlu0 %1000
  %1002 = vrot.lane.b32.xlu0 %v991, 33
  %v1003 = vpop.permute.xlu0 %1002
  %1004 = vrot.lane.b32.xlu0 %v992, 33
  %v1005 = vpop.permute.xlu0 %1004
  %1006 = vrot.lane.b32.xlu0 %v993, 33
  %v1007 = vpop.permute.xlu0 %1006
  %1008 = vrot.lane.b32.xlu0 %v994, 33
  %v1009 = vpop.permute.xlu0 %1008
  %1010 = vrot.lane.b32.xlu0 %v995, 33
  %v1011 = vpop.permute.xlu0 %1010
  %1012 = vrot.lane.b32.xlu0 %v996, 33
  %v1013 = vpop.permute.xlu0 %1012
  %1014 = vrot.lane.b32.xlu0 %v997, 33
  %v1015 = vpop.permute.xlu0 %1014
  %1016 = vrot.lane.b32.xlu0 %v999, 33
  %v1017 = vpop.permute.xlu0 %1016
  %v1018 = vsel %vm124, %v1001, %v1003
  %v1019 = vsel %vm124, %v1003, %v1005
  %v1020 = vsel %vm124, %v1005, %v1007
  %v1021 = vsel %vm124, %v1007, %v1009
  %v1022 = vsel %vm124, %v1009, %v1011
  %v1023 = vsel %vm124, %v1011, %v1013
  %v1024 = vsel %vm124, %v1013, %v1015
  %v1025 = vsel %vm124, %v1015, %v1017
  %1034 = vst [vmem:[#allocation3 + $0x40] sm:$0xf] %v1018
  %1035 = vst [vmem:[#allocation3 + $0x48] sm:$0xf] %v1019
  %1036 = vst [vmem:[#allocation3 + $0x50] sm:$0xf] %v1020
  %1037 = vst [vmem:[#allocation3 + $0x58] sm:$0xf] %v1021
  %1038 = vst [vmem:[#allocation3 + $0x60] sm:$0xf] %v1022
  %1039 = vst [vmem:[#allocation3 + $0x68] sm:$0xf] %v1023
  %1040 = vst [vmem:[#allocation3 + $0x70] sm:$0xf] %v1024
  %1041 = vst [vmem:[#allocation3 + $0x78] sm:$0xf] %v1025
  %v1042 = vld [vmem:[#allocation2] sm:$0xff]
  %v1043 = vld [vmem:[#allocation2 + $0x8] sm:$0xff]
  %v1044 = vld [vmem:[#allocation2 + $0x10] sm:$0xff]
  %v1045 = vld [vmem:[#allocation2 + $0x18] sm:$0xff]
  %v1046 = vld [vmem:[#allocation2 + $0x20] sm:$0xf]
  %s1052 = scalar_lea.vmem [#allocation1], 1
  %1053 = vst [vmem:[%s1052] ss:$2 sm:$0xff] %v1042
  %s1054 = scalar_lea.vmem [#allocation1], 17
  %1055 = vst [vmem:[%s1054] ss:$2 sm:$0xff] %v1043
  %s1056 = scalar_lea.vmem [#allocation1], 33
  %1057 = vst [vmem:[%s1056] ss:$2 sm:$0xff] %v1044
  %s1058 = scalar_lea.vmem [#allocation1], 49
  %1059 = vst [vmem:[%s1058] ss:$2 sm:$0xff] %v1045
  %v1060 = vld.sshfl [vmem:[#allocation1] sm:$0xff pattern:$0x75316420]
  %v1061 = vld.sshfl [vmem:[#allocation1 + $0x8] sm:$0xff pattern:$0x75316420]
  %v1062 = vld.sshfl [vmem:[#allocation1 + $0x10] sm:$0xff pattern:$0x75316420]
  %v1063 = vld.sshfl [vmem:[#allocation1 + $0x18] sm:$0xff pattern:$0x75316420]
  %v1064 = vld.sshfl [vmem:[#allocation1 + $0x20] sm:$0xff pattern:$0x75316420]
  %v1065 = vld.sshfl [vmem:[#allocation1 + $0x28] sm:$0xff pattern:$0x75316420]
  %v1066 = vld.sshfl [vmem:[#allocation1 + $0x30] sm:$0xff pattern:$0x75316420]
  %v1067 = vld.sshfl [vmem:[#allocation1 + $0x38] sm:$0xff pattern:$0x75316420]
  %1068 = vst [vmem:[%s1052] ss:$2 sm:$0xff] %v1046
  %v1069 = vld.sshfl [vmem:[#allocation1] sm:$0xff pattern:$0x75316420]
  %1070 = vrot.lane.b32.xlu0 %v1060, 32
  %v1071 = vpop.permute.xlu0 %1070
  %1072 = vrot.lane.b32.xlu0 %v1061, 32
  %v1073 = vpop.permute.xlu0 %1072
  %1074 = vrot.lane.b32.xlu0 %v1062, 32
  %v1075 = vpop.permute.xlu0 %1074
  %1076 = vrot.lane.b32.xlu0 %v1063, 32
  %v1077 = vpop.permute.xlu0 %1076
  %1078 = vrot.lane.b32.xlu0 %v1064, 32
  %v1079 = vpop.permute.xlu0 %1078
  %1080 = vrot.lane.b32.xlu0 %v1065, 32
  %v1081 = vpop.permute.xlu0 %1080
  %1082 = vrot.lane.b32.xlu0 %v1066, 32
  %v1083 = vpop.permute.xlu0 %1082
  %1084 = vrot.lane.b32.xlu0 %v1067, 32
  %v1085 = vpop.permute.xlu0 %1084
  %1086 = vrot.lane.b32.xlu0 %v1069, 32
  %v1087 = vpop.permute.xlu0 %1086
  %v1088 = vsel %vm195, %v1071, %v1073
  %v1089 = vsel %vm195, %v1073, %v1075
  %v1090 = vsel %vm195, %v1075, %v1077
  %v1091 = vsel %vm195, %v1077, %v1079
  %v1092 = vsel %vm195, %v1079, %v1081
  %v1093 = vsel %vm195, %v1081, %v1083
  %v1094 = vsel %vm195, %v1083, %v1085
  %v1095 = vsel %vm195, %v1085, %v1087
  %1104 = vst [vmem:[#allocation3 + $0x40] sm:$0xf0] %v1088
  %1105 = vst [vmem:[#allocation3 + $0x48] sm:$0xf0] %v1089
  %1106 = vst [vmem:[#allocation3 + $0x50] sm:$0xf0] %v1090
  %1107 = vst [vmem:[#allocation3 + $0x58] sm:$0xf0] %v1091
  %1108 = vst [vmem:[#allocation3 + $0x60] sm:$0xf0] %v1092
  %1109 = vst [vmem:[#allocation3 + $0x68] sm:$0xf0] %v1093
  %1110 = vst [vmem:[#allocation3 + $0x70] sm:$0xf0] %v1094
  %1111 = vst [vmem:[#allocation3 + $0x78] sm:$0xf0] %v1095
  %v1112 = vld [vmem:[#allocation2] sm:$0xff]
  %v1113 = vld [vmem:[#allocation2 + $0x8] sm:$0xff]
  %v1114 = vld [vmem:[#allocation2 + $0x10] sm:$0xff]
  %v1115 = vld [vmem:[#allocation2 + $0x18] sm:$0xff]
  %v1116 = vld [vmem:[#allocation2 + $0x20] sm:$0xf]
  %v1117 = vld [vmem:[%s225] ss:$2 sm:$0xff]
  %v1119 = vperm.slane %v1117, 0
  %v1120 = vperm.slane %v1117, 1
  %v1121 = vperm.slane %v1117, 2
  %v1122 = vperm.slane %v1117, 3
  %v1123 = vperm.slane %v1117, 4
  %v1124 = vperm.slane %v1117, 5
  %v1125 = vperm.slane %v1117, 6
  %v1126 = vperm.slane %v1117, 7
  %v1127 = vrot.slane %v1120, 4
  %v1128 = vrot.slane %v1122, 4
  %v1129 = vrot.slane %v1124, 4
  %v1130 = vrot.slane %v1126, 4
  %v1131 = vsel %vm49, %v1119, %v1127
  %v1132 = vsel %vm49, %v1121, %v1128
  %v1133 = vsel %vm49, %v1123, %v1129
  %v1134 = vsel %vm49, %v1125, %v1130
  %1135 = vrot.lane.b32.xlu0 %v1131, 97
  %v1136 = vpop.permute.xlu0 %1135
  %1137 = vrot.lane.b32.xlu0 %v1132, 97
  %v1138 = vpop.permute.xlu0 %1137
  %1139 = vrot.lane.b32.xlu0 %v1133, 97
  %v1140 = vpop.permute.xlu0 %1139
  %1141 = vrot.lane.b32.xlu0 %v1134, 97
  %v1142 = vpop.permute.xlu0 %1141
  %v1143 = vrot.slane %v1136, 4
  %v1144 = vrot.slane %v1138, 4
  %v1145 = vrot.slane %v1140, 4
  %v1146 = vrot.slane %v1142, 4
  %v1147 = vsel %vm256, %v1143, %v1136
  %v1148 = vsel %vm49, %v1143, %v1144
  %v1149 = vsel %vm256, %v1148, %v1138
  %v1150 = vsel %vm49, %v1144, %v1145
  %v1151 = vsel %vm256, %v1150, %v1140
  %v1152 = vsel %vm49, %v1145, %v1146
  %v1153 = vsel %vm256, %v1152, %v1142
  %v1159 = vmul.f32 %v1112, %v1147
  %v1160 = vmul.f32 %v1113, %v1149
  %v1161 = vmul.f32 %v1114, %v1151
  %v1162 = vmul.f32 %v1115, %v1153
  %v1163 = vmul.f32 %v1116, %v1146
  %1169 = vst [vmem:[#allocation1] ss:$2 sm:$0xff] %v1159
  %s1170 = scalar_lea.vmem [#allocation1], 16
  %1171 = vst [vmem:[%s1170] ss:$2 sm:$0xff] %v1160
  %s1172 = scalar_lea.vmem [#allocation1], 32
  %1173 = vst [vmem:[%s1172] ss:$2 sm:$0xff] %v1161
  %s1174 = scalar_lea.vmem [#allocation1], 48
  %1175 = vst [vmem:[%s1174] ss:$2 sm:$0xff] %v1162
  %v1176 = vld.sshfl [vmem:[#allocation1] sm:$0xff pattern:$0x75316420]
  %v1177 = vld.sshfl [vmem:[#allocation1 + $0x8] sm:$0xff pattern:$0x75316420]
  %v1178 = vld.sshfl [vmem:[#allocation1 + $0x10] sm:$0xff pattern:$0x75316420]
  %v1179 = vld.sshfl [vmem:[#allocation1 + $0x18] sm:$0xff pattern:$0x75316420]
  %v1180 = vld.sshfl [vmem:[#allocation1 + $0x20] sm:$0xff pattern:$0x75316420]
  %v1181 = vld.sshfl [vmem:[#allocation1 + $0x28] sm:$0xff pattern:$0x75316420]
  %v1182 = vld.sshfl [vmem:[#allocation1 + $0x30] sm:$0xff pattern:$0x75316420]
  %v1183 = vld.sshfl [vmem:[#allocation1 + $0x38] sm:$0xff pattern:$0x75316420]
  %1184 = vst [vmem:[#allocation1] ss:$2 sm:$0xff] %v1163
  %v1185 = vld.sshfl [vmem:[#allocation1] sm:$0xff pattern:$0x75316420]
  %1186 = vrot.lane.b32.xlu0 %v1176, 31
  %v1187 = vpop.permute.xlu0 %1186
  %1188 = vrot.lane.b32.xlu0 %v1177, 31
  %v1189 = vpop.permute.xlu0 %1188
  %1190 = vrot.lane.b32.xlu0 %v1178, 31
  %v1191 = vpop.permute.xlu0 %1190
  %1192 = vrot.lane.b32.xlu0 %v1179, 31
  %v1193 = vpop.permute.xlu0 %1192
  %1194 = vrot.lane.b32.xlu0 %v1180, 31
  %v1195 = vpop.permute.xlu0 %1194
  %1196 = vrot.lane.b32.xlu0 %v1181, 31
  %v1197 = vpop.permute.xlu0 %1196
  %1198 = vrot.lane.b32.xlu0 %v1182, 31
  %v1199 = vpop.permute.xlu0 %1198
  %1200 = vrot.lane.b32.xlu0 %v1183, 31
  %v1201 = vpop.permute.xlu0 %1200
  %1202 = vrot.lane.b32.xlu0 %v1185, 31
  %v1203 = vpop.permute.xlu0 %1202
  %v1204 = vsel %vm314, %v1187, %v1189
  %v1205 = vsel %vm314, %v1189, %v1191
  %v1206 = vsel %vm314, %v1191, %v1193
  %v1207 = vsel %vm314, %v1193, %v1195
  %v1208 = vsel %vm314, %v1195, %v1197
  %v1209 = vsel %vm314, %v1197, %v1199
  %v1210 = vsel %vm314, %v1199, %v1201
  %v1211 = vsel %vm314, %v1201, %v1203
  %1220 = vst [vmem:[#allocation3 + $0xc0] sm:$0xf] %v1204
  %1221 = vst [vmem:[#allocation3 + $0xc8] sm:$0xf] %v1205
  %1222 = vst [vmem:[#allocation3 + $0xd0] sm:$0xf] %v1206
  %1223 = vst [vmem:[#allocation3 + $0xd8] sm:$0xf] %v1207
  %1224 = vst [vmem:[#allocation3 + $0xe0] sm:$0xf] %v1208
  %1225 = vst [vmem:[#allocation3 + $0xe8] sm:$0xf] %v1209
  %1226 = vst [vmem:[#allocation3 + $0xf0] sm:$0xf] %v1210
  %1227 = vst [vmem:[#allocation3 + $0xf8] sm:$0xf] %v1211
  %v1228 = vld [vmem:[#allocation2] sm:$0xff]
  %v1229 = vld [vmem:[#allocation2 + $0x8] sm:$0xff]
  %v1230 = vld [vmem:[#allocation2 + $0x10] sm:$0xff]
  %v1231 = vld [vmem:[#allocation2 + $0x18] sm:$0xff]
  %v1232 = vld [vmem:[#allocation2 + $0x20] sm:$0xf]
  %v1233 = vld [vmem:[%s3] ss:$2 sm:$0xff]
  %v1235 = vperm.slane %v1233, 0
  %v1236 = vperm.slane %v1233, 1
  %v1237 = vperm.slane %v1233, 2
  %v1238 = vperm.slane %v1233, 3
  %v1239 = vperm.slane %v1233, 4
  %v1240 = vperm.slane %v1233, 5
  %v1241 = vperm.slane %v1233, 6
  %v1242 = vperm.slane %v1233, 7
  %v1243 = vrot.slane %v1236, 4
  %v1244 = vrot.slane %v1238, 4
  %v1245 = vrot.slane %v1240, 4
  %v1246 = vrot.slane %v1242, 4
  %v1247 = vsel %vm49, %v1235, %v1243
  %v1248 = vsel %vm49, %v1237, %v1244
  %v1249 = vsel %vm49, %v1239, %v1245
  %v1250 = vsel %vm49, %v1241, %v1246
  %1251 = vrot.lane.b32.xlu0 %v1247, 127
  %v1252 = vpop.permute.xlu0 %1251
  %1253 = vrot.lane.b32.xlu0 %v1248, 127
  %v1254 = vpop.permute.xlu0 %1253
  %1255 = vrot.lane.b32.xlu0 %v1249, 127
  %v1256 = vpop.permute.xlu0 %1255
  %1257 = vrot.lane.b32.xlu0 %v1250, 127
  %v1258 = vpop.permute.xlu0 %1257
  %v1259 = vrot.slane %v1252, 4
  %v1260 = vrot.slane %v1254, 4
  %v1261 = vrot.slane %v1256, 4
  %v1262 = vrot.slane %v1258, 4
  %v1263 = vsel %vm374, %v1259, %v1252
  %v1264 = vsel %vm49, %v1259, %v1260
  %v1265 = vsel %vm374, %v1264, %v1254
  %v1266 = vsel %vm49, %v1260, %v1261
  %v1267 = vsel %vm374, %v1266, %v1256
  %v1268 = vsel %vm49, %v1261, %v1262
  %v1269 = vsel %vm374, %v1268, %v1258
  %v1275 = vmul.f32 %v1228, %v1263
  %v1276 = vmul.f32 %v1229, %v1265
  %v1277 = vmul.f32 %v1230, %v1267
  %v1278 = vmul.f32 %v1231, %v1269
  %v1279 = vmul.f32 %v1232, %v1262
  %s1285 = scalar_lea.vmem [#allocation1], 1
  %1286 = vst [vmem:[%s1285] ss:$2 sm:$0xff] %v1275
  %s1287 = scalar_lea.vmem [#allocation1], 17
  %1288 = vst [vmem:[%s1287] ss:$2 sm:$0xff] %v1276
  %s1289 = scalar_lea.vmem [#allocation1], 33
  %1290 = vst [vmem:[%s1289] ss:$2 sm:$0xff] %v1277
  %s1291 = scalar_lea.vmem [#allocation1], 49
  %1292 = vst [vmem:[%s1291] ss:$2 sm:$0xff] %v1278
  %v1293 = vld.sshfl [vmem:[#allocation1] sm:$0xff pattern:$0x75316420]
  %v1294 = vld.sshfl [vmem:[#allocation1 + $0x8] sm:$0xff pattern:$0x75316420]
  %v1295 = vld.sshfl [vmem:[#allocation1 + $0x10] sm:$0xff pattern:$0x75316420]
  %v1296 = vld.sshfl [vmem:[#allocation1 + $0x18] sm:$0xff pattern:$0x75316420]
  %v1297 = vld.sshfl [vmem:[#allocation1 + $0x20] sm:$0xff pattern:$0x75316420]
  %v1298 = vld.sshfl [vmem:[#allocation1 + $0x28] sm:$0xff pattern:$0x75316420]
  %v1299 = vld.sshfl [vmem:[#allocation1 + $0x30] sm:$0xff pattern:$0x75316420]
  %v1300 = vld.sshfl [vmem:[#allocation1 + $0x38] sm:$0xff pattern:$0x75316420]
  %1301 = vst [vmem:[%s1285] ss:$2 sm:$0xff] %v1279
  %v1302 = vld.sshfl [vmem:[#allocation1] sm:$0xff pattern:$0x75316420]
  %1303 = vrot.lane.b32.xlu0 %v1293, 1
  %v1304 = vpop.permute.xlu0 %1303
  %1305 = vrot.lane.b32.xlu0 %v1294, 1
  %v1306 = vpop.permute.xlu0 %1305
  %1307 = vrot.lane.b32.xlu0 %v1295, 1
  %v1308 = vpop.permute.xlu0 %1307
  %1309 = vrot.lane.b32.xlu0 %v1296, 1
  %v1310 = vpop.permute.xlu0 %1309
  %1311 = vrot.lane.b32.xlu0 %v1297, 1
  %v1312 = vpop.permute.xlu0 %1311
  %1313 = vrot.lane.b32.xlu0 %v1298, 1
  %v1314 = vpop.permute.xlu0 %1313
  %1315 = vrot.lane.b32.xlu0 %v1299, 1
  %v1316 = vpop.permute.xlu0 %1315
  %1317 = vrot.lane.b32.xlu0 %v1300, 1
  %v1318 = vpop.permute.xlu0 %1317
  %1319 = vrot.lane.b32.xlu0 %v1302, 1
  %v1320 = vpop.permute.xlu0 %1319
  %v1321 = vsel %vm433, %v1304, %v1306
  %v1322 = vsel %vm433, %v1306, %v1308
  %v1323 = vsel %vm433, %v1308, %v1310
  %v1324 = vsel %vm433, %v1310, %v1312
  %v1325 = vsel %vm433, %v1312, %v1314
  %v1326 = vsel %vm433, %v1314, %v1316
  %v1327 = vsel %vm433, %v1316, %v1318
  %v1328 = vsel %vm433, %v1318, %v1320
  %1337 = vst [vmem:[#allocation3 + $0xc0] sm:$0xf0] %v1321
  %1338 = vst [vmem:[#allocation3 + $0xc8] sm:$0xf0] %v1322
  %1339 = vst [vmem:[#allocation3 + $0xd0] sm:$0xf0] %v1323
  %1340 = vst [vmem:[#allocation3 + $0xd8] sm:$0xf0] %v1324
  %1341 = vst [vmem:[#allocation3 + $0xe0] sm:$0xf0] %v1325
  %1342 = vst [vmem:[#allocation3 + $0xe8] sm:$0xf0] %v1326
  %1343 = vst [vmem:[#allocation3 + $0xf0] sm:$0xf0] %v1327
  %1344 = vst [vmem:[#allocation3 + $0xf8] sm:$0xf0] %v1328
  %v1345 = vld [vmem:[#allocation2 + $0x4] sm:$0xff]
  %v1346 = vld [vmem:[#allocation2 + $0xc] sm:$0xff]
  %v1347 = vld [vmem:[#allocation2 + $0x14] sm:$0xff]
  %v1348 = vld [vmem:[#allocation2 + $0x1c] sm:$0xff]
  %1353 = vst [vmem:[#allocation1] ss:$2 sm:$0xff] %v1345
  %s1354 = scalar_lea.vmem [#allocation1], 16
  %1355 = vst [vmem:[%s1354] ss:$2 sm:$0xff] %v1346
  %s1356 = scalar_lea.vmem [#allocation1], 32
  %1357 = vst [vmem:[%s1356] ss:$2 sm:$0xff] %v1347
  %s1358 = scalar_lea.vmem [#allocation1], 48
  %1359 = vst [vmem:[%s1358] ss:$2 sm:$0xff] %v1348
  %v1360 = vld.sshfl [vmem:[#allocation1] sm:$0xff pattern:$0x75316420]
  %v1361 = vld.sshfl [vmem:[#allocation1 + $0x8] sm:$0xff pattern:$0x75316420]
  %v1362 = vld.sshfl [vmem:[#allocation1 + $0x10] sm:$0xff pattern:$0x75316420]
  %v1363 = vld.sshfl [vmem:[#allocation1 + $0x18] sm:$0xff pattern:$0x75316420]
  %v1364 = vld.sshfl [vmem:[#allocation1 + $0x20] sm:$0xff pattern:$0x75316420]
  %v1365 = vld.sshfl [vmem:[#allocation1 + $0x28] sm:$0xff pattern:$0x75316420]
  %v1366 = vld.sshfl [vmem:[#allocation1 + $0x30] sm:$0xff pattern:$0x75316420]
  %v1367 = vld.sshfl [vmem:[#allocation1 + $0x38] sm:$0xff pattern:$0x75316420]
  %1376 = vst [vmem:[#allocation3 + $0x140] sm:$0xf] %v1360
  %1377 = vst [vmem:[#allocation3 + $0x148] sm:$0xf] %v1361
  %1378 = vst [vmem:[#allocation3 + $0x150] sm:$0xf] %v1362
  %1379 = vst [vmem:[#allocation3 + $0x158] sm:$0xf] %v1363
  %1380 = vst [vmem:[#allocation3 + $0x160] sm:$0xf] %v1364
  %1381 = vst [vmem:[#allocation3 + $0x168] sm:$0xf] %v1365
  %1382 = vst [vmem:[#allocation3 + $0x170] sm:$0xf] %v1366
  %1383 = vst [vmem:[#allocation3 + $0x178] sm:$0xf] %v1367
  %v1384 = vld [vmem:[#allocation2 + $0x4] sm:$0xff]
  %v1385 = vld [vmem:[#allocation2 + $0xc] sm:$0xff]
  %v1386 = vld [vmem:[#allocation2 + $0x14] sm:$0xff]
  %v1387 = vld [vmem:[#allocation2 + $0x1c] sm:$0xff]
  %v1388 = vld [vmem:[#allocation2 + $0x24] sm:$0xf]
  %v1389 = vld [vmem:[%s225] ss:$2 sm:$0xff]
  %v1391 = vperm.slane %v1389, 0
  %v1392 = vperm.slane %v1389, 1
  %v1393 = vperm.slane %v1389, 2
  %v1394 = vperm.slane %v1389, 3
  %v1395 = vperm.slane %v1389, 4
  %v1396 = vperm.slane %v1389, 5
  %v1397 = vperm.slane %v1389, 6
  %v1398 = vperm.slane %v1389, 7
  %v1399 = vrot.slane %v1392, 4
  %v1400 = vrot.slane %v1394, 4
  %v1401 = vrot.slane %v1396, 4
  %v1402 = vrot.slane %v1398, 4
  %v1403 = vsel %vm49, %v1391, %v1399
  %v1404 = vsel %vm49, %v1393, %v1400
  %v1405 = vsel %vm49, %v1395, %v1401
  %v1406 = vsel %vm49, %v1397, %v1402
  %1407 = vrot.lane.b32.xlu0 %v1403, 1
  %v1408 = vpop.permute.xlu0 %1407
  %1409 = vrot.lane.b32.xlu0 %v1404, 1
  %v1410 = vpop.permute.xlu0 %1409
  %1411 = vrot.lane.b32.xlu0 %v1405, 1
  %v1412 = vpop.permute.xlu0 %1411
  %1413 = vrot.lane.b32.xlu0 %v1406, 1
  %v1414 = vpop.permute.xlu0 %1413
  %v1415 = vrot.slane %v1408, 4
  %v1416 = vrot.slane %v1410, 4
  %v1417 = vrot.slane %v1412, 4
  %v1418 = vrot.slane %v1414, 4
  %v1419 = vsel %vm433, %v1415, %v1408
  %v1420 = vsel %vm49, %v1415, %v1416
  %v1421 = vsel %vm433, %v1420, %v1410
  %v1422 = vsel %vm49, %v1416, %v1417
  %v1423 = vsel %vm433, %v1422, %v1412
  %v1424 = vsel %vm49, %v1417, %v1418
  %v1425 = vsel %vm433, %v1424, %v1414
  %v1431 = vmul.f32 %v1384, %v1419
  %v1432 = vmul.f32 %v1385, %v1421
  %v1433 = vmul.f32 %v1386, %v1423
  %v1434 = vmul.f32 %v1387, %v1425
  %v1435 = vmul.f32 %v1388, %v1418
  %s1441 = scalar_lea.vmem [#allocation1], 1
  %1442 = vst [vmem:[%s1441] ss:$2 sm:$0xff] %v1431
  %s1443 = scalar_lea.vmem [#allocation1], 17
  %1444 = vst [vmem:[%s1443] ss:$2 sm:$0xff] %v1432
  %s1445 = scalar_lea.vmem [#allocation1], 33
  %1446 = vst [vmem:[%s1445] ss:$2 sm:$0xff] %v1433
  %s1447 = scalar_lea.vmem [#allocation1], 49
  %1448 = vst [vmem:[%s1447] ss:$2 sm:$0xff] %v1434
  %v1449 = vld.sshfl [vmem:[#allocation1] sm:$0xff pattern:$0x75316420]
  %v1450 = vld.sshfl [vmem:[#allocation1 + $0x8] sm:$0xff pattern:$0x75316420]
  %v1451 = vld.sshfl [vmem:[#allocation1 + $0x10] sm:$0xff pattern:$0x75316420]
  %v1452 = vld.sshfl [vmem:[#allocation1 + $0x18] sm:$0xff pattern:$0x75316420]
  %v1453 = vld.sshfl [vmem:[#allocation1 + $0x20] sm:$0xff pattern:$0x75316420]
  %v1454 = vld.sshfl [vmem:[#allocation1 + $0x28] sm:$0xff pattern:$0x75316420]
  %v1455 = vld.sshfl [vmem:[#allocation1 + $0x30] sm:$0xff pattern:$0x75316420]
  %v1456 = vld.sshfl [vmem:[#allocation1 + $0x38] sm:$0xff pattern:$0x75316420]
  %1457 = vst [vmem:[%s1441] ss:$2 sm:$0xff] %v1435
  %v1458 = vld.sshfl [vmem:[#allocation1] sm:$0xff pattern:$0x75316420]
  %1459 = vrot.lane.b32.xlu0 %v1449, 127
  %v1460 = vpop.permute.xlu0 %1459
  %1461 = vrot.lane.b32.xlu0 %v1450, 127
  %v1462 = vpop.permute.xlu0 %1461
  %1463 = vrot.lane.b32.xlu0 %v1451, 127
  %v1464 = vpop.permute.xlu0 %1463
  %1465 = vrot.lane.b32.xlu0 %v1452, 127
  %v1466 = vpop.permute.xlu0 %1465
  %1467 = vrot.lane.b32.xlu0 %v1453, 127
  %v1468 = vpop.permute.xlu0 %1467
  %1469 = vrot.lane.b32.xlu0 %v1454, 127
  %v1470 = vpop.permute.xlu0 %1469
  %1471 = vrot.lane.b32.xlu0 %v1455, 127
  %v1472 = vpop.permute.xlu0 %1471
  %1473 = vrot.lane.b32.xlu0 %v1456, 127
  %v1474 = vpop.permute.xlu0 %1473
  %1475 = vrot.lane.b32.xlu0 %v1458, 127
  %v1476 = vpop.permute.xlu0 %1475
  %v1477 = vsel %vm374, %v1460, %v1462
  %v1478 = vsel %vm374, %v1462, %v1464
  %v1479 = vsel %vm374, %v1464, %v1466
  %v1480 = vsel %vm374, %v1466, %v1468
  %v1481 = vsel %vm374, %v1468, %v1470
  %v1482 = vsel %vm374, %v1470, %v1472
  %v1483 = vsel %vm374, %v1472, %v1474
  %v1484 = vsel %vm374, %v1474, %v1476
  %1493 = vst [vmem:[#allocation3 + $0x140] sm:$0xf0] %v1477
  %1494 = vst [vmem:[#allocation3 + $0x148] sm:$0xf0] %v1478
  %1495 = vst [vmem:[#allocation3 + $0x150] sm:$0xf0] %v1479
  %1496 = vst [vmem:[#allocation3 + $0x158] sm:$0xf0] %v1480
  %1497 = vst [vmem:[#allocation3 + $0x160] sm:$0xf0] %v1481
  %1498 = vst [vmem:[#allocation3 + $0x168] sm:$0xf0] %v1482
  %1499 = vst [vmem:[#allocation3 + $0x170] sm:$0xf0] %v1483
  %1500 = vst [vmem:[#allocation3 + $0x178] sm:$0xf0] %v1484
  %v1501 = vld [vmem:[#allocation2 + $0x4] sm:$0xff]
  %v1502 = vld [vmem:[#allocation2 + $0xc] sm:$0xff]
  %v1503 = vld [vmem:[#allocation2 + $0x14] sm:$0xff]
  %v1504 = vld [vmem:[#allocation2 + $0x1c] sm:$0xff]
  %v1505 = vld [vmem:[#allocation2 + $0x24] sm:$0xf]
  %v1506 = vld [vmem:[%s3] ss:$2 sm:$0xff]
  %v1508 = vperm.slane %v1506, 0
  %v1509 = vperm.slane %v1506, 1
  %v1510 = vperm.slane %v1506, 2
  %v1511 = vperm.slane %v1506, 3
  %v1512 = vperm.slane %v1506, 4
  %v1513 = vperm.slane %v1506, 5
  %v1514 = vperm.slane %v1506, 6
  %v1515 = vperm.slane %v1506, 7
  %v1516 = vrot.slane %v1509, 4
  %v1517 = vrot.slane %v1511, 4
  %v1518 = vrot.slane %v1513, 4
  %v1519 = vrot.slane %v1515, 4
  %v1520 = vsel %vm49, %v1508, %v1516
  %v1521 = vsel %vm49, %v1510, %v1517
  %v1522 = vsel %vm49, %v1512, %v1518
  %v1523 = vsel %vm49, %v1514, %v1519
  %1524 = vrot.lane.b32.xlu0 %v1520, 31
  %v1525 = vpop.permute.xlu0 %1524
  %1526 = vrot.lane.b32.xlu0 %v1521, 31
  %v1527 = vpop.permute.xlu0 %1526
  %1528 = vrot.lane.b32.xlu0 %v1522, 31
  %v1529 = vpop.permute.xlu0 %1528
  %1530 = vrot.lane.b32.xlu0 %v1523, 31
  %v1531 = vpop.permute.xlu0 %1530
  %v1532 = vrot.slane %v1525, 4
  %v1533 = vrot.slane %v1527, 4
  %v1534 = vrot.slane %v1529, 4
  %v1535 = vrot.slane %v1531, 4
  %v1536 = vsel %vm314, %v1532, %v1525
  %v1537 = vsel %vm49, %v1532, %v1533
  %v1538 = vsel %vm314, %v1537, %v1527
  %v1539 = vsel %vm49, %v1533, %v1534
  %v1540 = vsel %vm314, %v1539, %v1529
  %v1541 = vsel %vm49, %v1534, %v1535
  %v1542 = vsel %vm314, %v1541, %v1531
  %v1548 = vmul.f32 %v1501, %v1536
  %v1549 = vmul.f32 %v1502, %v1538
  %v1550 = vmul.f32 %v1503, %v1540
  %v1551 = vmul.f32 %v1504, %v1542
  %v1552 = vmul.f32 %v1505, %v1535
  %1558 = vst [vmem:[#allocation1] ss:$2 sm:$0xff] %v1548
  %s1559 = scalar_lea.vmem [#allocation1], 16
  %1560 = vst [vmem:[%s1559] ss:$2 sm:$0xff] %v1549
  %s1561 = scalar_lea.vmem [#allocation1], 32
  %1562 = vst [vmem:[%s1561] ss:$2 sm:$0xff] %v1550
  %s1563 = scalar_lea.vmem [#allocation1], 48
  %1564 = vst [vmem:[%s1563] ss:$2 sm:$0xff] %v1551
  %v1565 = vld.sshfl [vmem:[#allocation1] sm:$0xff pattern:$0x75316420]
  %v1566 = vld.sshfl [vmem:[#allocation1 + $0x8] sm:$0xff pattern:$0x75316420]
  %v1567 = vld.sshfl [vmem:[#allocation1 + $0x10] sm:$0xff pattern:$0x75316420]
  %v1568 = vld.sshfl [vmem:[#allocation1 + $0x18] sm:$0xff pattern:$0x75316420]
  %v1569 = vld.sshfl [vmem:[#allocation1 + $0x20] sm:$0xff pattern:$0x75316420]
  %v1570 = vld.sshfl [vmem:[#allocation1 + $0x28] sm:$0xff pattern:$0x75316420]
  %v1571 = vld.sshfl [vmem:[#allocation1 + $0x30] sm:$0xff pattern:$0x75316420]
  %v1572 = vld.sshfl [vmem:[#allocation1 + $0x38] sm:$0xff pattern:$0x75316420]
  %1573 = vst [vmem:[#allocation1] ss:$2 sm:$0xff] %v1552
  %v1574 = vld.sshfl [vmem:[#allocation1] sm:$0xff pattern:$0x75316420]
  %1575 = vrot.lane.b32.xlu0 %v1565, 97
  %v1576 = vpop.permute.xlu0 %1575
  %1577 = vrot.lane.b32.xlu0 %v1566, 97
  %v1578 = vpop.permute.xlu0 %1577
  %1579 = vrot.lane.b32.xlu0 %v1567, 97
  %v1580 = vpop.permute.xlu0 %1579
  %1581 = vrot.lane.b32.xlu0 %v1568, 97
  %v1582 = vpop.permute.xlu0 %1581
  %1583 = vrot.lane.b32.xlu0 %v1569, 97
  %v1584 = vpop.permute.xlu0 %1583
  %1585 = vrot.lane.b32.xlu0 %v1570, 97
  %v1586 = vpop.permute.xlu0 %1585
  %1587 = vrot.lane.b32.xlu0 %v1571, 97
  %v1588 = vpop.permute.xlu0 %1587
  %1589 = vrot.lane.b32.xlu0 %v1572, 97
  %v1590 = vpop.permute.xlu0 %1589
  %1591 = vrot.lane.b32.xlu0 %v1574, 97
  %v1592 = vpop.permute.xlu0 %1591
  %v1593 = vsel %vm256, %v1576, %v1578
  %v1594 = vsel %vm256, %v1578, %v1580
  %v1595 = vsel %vm256, %v1580, %v1582
  %v1596 = vsel %vm256, %v1582, %v1584
  %v1597 = vsel %vm256, %v1584, %v1586
  %v1598 = vsel %vm256, %v1586, %v1588
  %v1599 = vsel %vm256, %v1588, %v1590
  %v1600 = vsel %vm256, %v1590, %v1592
  %1609 = vst [vmem:[#allocation3 + $0x1c0] sm:$0xf] %v1593
  %1610 = vst [vmem:[#allocation3 + $0x1c8] sm:$0xf] %v1594
  %1611 = vst [vmem:[#allocation3 + $0x1d0] sm:$0xf] %v1595
  %1612 = vst [vmem:[#allocation3 + $0x1d8] sm:$0xf] %v1596
  %1613 = vst [vmem:[#allocation3 + $0x1e0] sm:$0xf] %v1597
  %1614 = vst [vmem:[#allocation3 + $0x1e8] sm:$0xf] %v1598
  %1615 = vst [vmem:[#allocation3 + $0x1f0] sm:$0xf] %v1599
  %1616 = vst [vmem:[#allocation3 + $0x1f8] sm:$0xf] %v1600
  %v1617 = vld [vmem:[#allocation2 + $0x4] sm:$0xff]
  %v1618 = vld [vmem:[#allocation2 + $0xc] sm:$0xff]
  %v1619 = vld [vmem:[#allocation2 + $0x14] sm:$0xff]
  %v1620 = vld [vmem:[#allocation2 + $0x1c] sm:$0xff]
  %v1621 = vld [vmem:[#allocation2 + $0x24] sm:$0xf]
  %s1627 = scalar_lea.vmem [#allocation1], 1
  %1628 = vst [vmem:[%s1627] ss:$2 sm:$0xff] %v1617
  %s1629 = scalar_lea.vmem [#allocation1], 17
  %1630 = vst [vmem:[%s1629] ss:$2 sm:$0xff] %v1618
  %s1631 = scalar_lea.vmem [#allocation1], 33
  %1632 = vst [vmem:[%s1631] ss:$2 sm:$0xff] %v1619
  %s1633 = scalar_lea.vmem [#allocation1], 49
  %1634 = vst [vmem:[%s1633] ss:$2 sm:$0xff] %v1620
  %v1635 = vld.sshfl [vmem:[#allocation1] sm:$0xff pattern:$0x75316420]
  %v1636 = vld.sshfl [vmem:[#allocation1 + $0x8] sm:$0xff pattern:$0x75316420]
  %v1637 = vld.sshfl [vmem:[#allocation1 + $0x10] sm:$0xff pattern:$0x75316420]
  %v1638 = vld.sshfl [vmem:[#allocation1 + $0x18] sm:$0xff pattern:$0x75316420]
  %v1639 = vld.sshfl [vmem:[#allocation1 + $0x20] sm:$0xff pattern:$0x75316420]
  %v1640 = vld.sshfl [vmem:[#allocation1 + $0x28] sm:$0xff pattern:$0x75316420]
  %v1641 = vld.sshfl [vmem:[#allocation1 + $0x30] sm:$0xff pattern:$0x75316420]
  %v1642 = vld.sshfl [vmem:[#allocation1 + $0x38] sm:$0xff pattern:$0x75316420]
  %1643 = vst [vmem:[%s1627] ss:$2 sm:$0xff] %v1621
  %v1644 = vld.sshfl [vmem:[#allocation1] sm:$0xff pattern:$0x75316420]
  %1645 = vrot.lane.b32.xlu0 %v1635, 96
  %v1646 = vpop.permute.xlu0 %1645
  %1647 = vrot.lane.b32.xlu0 %v1636, 96
  %v1648 = vpop.permute.xlu0 %1647
  %1649 = vrot.lane.b32.xlu0 %v1637, 96
  %v1650 = vpop.permute.xlu0 %1649
  %1651 = vrot.lane.b32.xlu0 %v1638, 96
  %v1652 = vpop.permute.xlu0 %1651
  %1653 = vrot.lane.b32.xlu0 %v1639, 96
  %v1654 = vpop.permute.xlu0 %1653
  %1655 = vrot.lane.b32.xlu0 %v1640, 96
  %v1656 = vpop.permute.xlu0 %1655
  %1657 = vrot.lane.b32.xlu0 %v1641, 96
  %v1658 = vpop.permute.xlu0 %1657
  %1659 = vrot.lane.b32.xlu0 %v1642, 96
  %v1660 = vpop.permute.xlu0 %1659
  %1661 = vrot.lane.b32.xlu0 %v1644, 96
  %v1662 = vpop.permute.xlu0 %1661
  %v1663 = vsel %vm776, %v1646, %v1648
  %v1664 = vsel %vm776, %v1648, %v1650
  %v1665 = vsel %vm776, %v1650, %v1652
  %v1666 = vsel %vm776, %v1652, %v1654
  %v1667 = vsel %vm776, %v1654, %v1656
  %v1668 = vsel %vm776, %v1656, %v1658
  %v1669 = vsel %vm776, %v1658, %v1660
  %v1670 = vsel %vm776, %v1660, %v1662
  %1679 = vst [vmem:[#allocation3 + $0x1c0] sm:$0xf0] %v1663
  %1680 = vst [vmem:[#allocation3 + $0x1c8] sm:$0xf0] %v1664
  %1681 = vst [vmem:[#allocation3 + $0x1d0] sm:$0xf0] %v1665
  %1682 = vst [vmem:[#allocation3 + $0x1d8] sm:$0xf0] %v1666
  %1683 = vst [vmem:[#allocation3 + $0x1e0] sm:$0xf0] %v1667
  %1684 = vst [vmem:[#allocation3 + $0x1e8] sm:$0xf0] %v1668
  %1685 = vst [vmem:[#allocation3 + $0x1f0] sm:$0xf0] %v1669
  %1686 = vst [vmem:[#allocation3 + $0x1f8] sm:$0xf0] %v1670
  %v1687 = vld [vmem:[#allocation2 + $0x4] sm:$0xff]
  %v1688 = vld [vmem:[#allocation2 + $0xc] sm:$0xff]
  %v1689 = vld [vmem:[#allocation2 + $0x14] sm:$0xff]
  %v1690 = vld [vmem:[#allocation2 + $0x1c] sm:$0xff]
  %v1691 = vld [vmem:[#allocation2 + $0x24] sm:$0xf]
  %v1692 = vld [vmem:[%s225] ss:$2 sm:$0xff]
  %v1694 = vperm.slane %v1692, 0
  %v1695 = vperm.slane %v1692, 1
  %v1696 = vperm.slane %v1692, 2
  %v1697 = vperm.slane %v1692, 3
  %v1698 = vperm.slane %v1692, 4
  %v1699 = vperm.slane %v1692, 5
  %v1700 = vperm.slane %v1692, 6
  %v1701 = vperm.slane %v1692, 7
  %v1702 = vrot.slane %v1695, 4
  %v1703 = vrot.slane %v1697, 4
  %v1704 = vrot.slane %v1699, 4
  %v1705 = vrot.slane %v1701, 4
  %v1706 = vsel %vm49, %v1694, %v1702
  %v1707 = vsel %vm49, %v1696, %v1703
  %v1708 = vsel %vm49, %v1698, %v1704
  %v1709 = vsel %vm49, %v1700, %v1705
  %1710 = vrot.lane.b32.xlu0 %v1706, 33
  %v1711 = vpop.permute.xlu0 %1710
  %1712 = vrot.lane.b32.xlu0 %v1707, 33
  %v1713 = vpop.permute.xlu0 %1712
  %1714 = vrot.lane.b32.xlu0 %v1708, 33
  %v1715 = vpop.permute.xlu0 %1714
  %1716 = vrot.lane.b32.xlu0 %v1709, 33
  %v1717 = vpop.permute.xlu0 %1716
  %v1718 = vrot.slane %v1711, 4
  %v1719 = vrot.slane %v1713, 4
  %v1720 = vrot.slane %v1715, 4
  %v1721 = vrot.slane %v1717, 4
  %v1722 = vsel %vm124, %v1718, %v1711
  %v1723 = vsel %vm49, %v1718, %v1719
  %v1724 = vsel %vm124, %v1723, %v1713
  %v1725 = vsel %vm49, %v1719, %v1720
  %v1726 = vsel %vm124, %v1725, %v1715
  %v1727 = vsel %vm49, %v1720, %v1721
  %v1728 = vsel %vm124, %v1727, %v1717
  %v1734 = vmul.f32 %v1687, %v1722
  %v1735 = vmul.f32 %v1688, %v1724
  %v1736 = vmul.f32 %v1689, %v1726
  %v1737 = vmul.f32 %v1690, %v1728
  %v1738 = vmul.f32 %v1691, %v1721
  %1744 = vst [vmem:[#allocation1] ss:$2 sm:$0xff] %v1734
  %s1745 = scalar_lea.vmem [#allocation1], 16
  %1746 = vst [vmem:[%s1745] ss:$2 sm:$0xff] %v1735
  %s1747 = scalar_lea.vmem [#allocation1], 32
  %1748 = vst [vmem:[%s1747] ss:$2 sm:$0xff] %v1736
  %s1749 = scalar_lea.vmem [#allocation1], 48
  %1750 = vst [vmem:[%s1749] ss:$2 sm:$0xff] %v1737
  %v1751 = vld.sshfl [vmem:[#allocation1] sm:$0xff pattern:$0x75316420]
  %v1752 = vld.sshfl [vmem:[#allocation1 + $0x8] sm:$0xff pattern:$0x75316420]
  %v1753 = vld.sshfl [vmem:[#allocation1 + $0x10] sm:$0xff pattern:$0x75316420]
  %v1754 = vld.sshfl [vmem:[#allocation1 + $0x18] sm:$0xff pattern:$0x75316420]
  %v1755 = vld.sshfl [vmem:[#allocation1 + $0x20] sm:$0xff pattern:$0x75316420]
  %v1756 = vld.sshfl [vmem:[#allocation1 + $0x28] sm:$0xff pattern:$0x75316420]
  %v1757 = vld.sshfl [vmem:[#allocation1 + $0x30] sm:$0xff pattern:$0x75316420]
  %v1758 = vld.sshfl [vmem:[#allocation1 + $0x38] sm:$0xff pattern:$0x75316420]
  %1759 = vst [vmem:[#allocation1] ss:$2 sm:$0xff] %v1738
  %v1760 = vld.sshfl [vmem:[#allocation1] sm:$0xff pattern:$0x75316420]
  %1761 = vrot.lane.b32.xlu0 %v1751, 95
  %v1762 = vpop.permute.xlu0 %1761
  %1763 = vrot.lane.b32.xlu0 %v1752, 95
  %v1764 = vpop.permute.xlu0 %1763
  %1765 = vrot.lane.b32.xlu0 %v1753, 95
  %v1766 = vpop.permute.xlu0 %1765
  %1767 = vrot.lane.b32.xlu0 %v1754, 95
  %v1768 = vpop.permute.xlu0 %1767
  %1769 = vrot.lane.b32.xlu0 %v1755, 95
  %v1770 = vpop.permute.xlu0 %1769
  %1771 = vrot.lane.b32.xlu0 %v1756, 95
  %v1772 = vpop.permute.xlu0 %1771
  %1773 = vrot.lane.b32.xlu0 %v1757, 95
  %v1774 = vpop.permute.xlu0 %1773
  %1775 = vrot.lane.b32.xlu0 %v1758, 95
  %v1776 = vpop.permute.xlu0 %1775
  %1777 = vrot.lane.b32.xlu0 %v1760, 95
  %v1778 = vpop.permute.xlu0 %1777
  %v1779 = vsel %vm66, %v1762, %v1764
  %v1780 = vsel %vm66, %v1764, %v1766
  %v1781 = vsel %vm66, %v1766, %v1768
  %v1782 = vsel %vm66, %v1768, %v1770
  %v1783 = vsel %vm66, %v1770, %v1772
  %v1784 = vsel %vm66, %v1772, %v1774
  %v1785 = vsel %vm66, %v1774, %v1776
  %v1786 = vsel %vm66, %v1776, %v1778
  %1795 = vst [vmem:[#allocation3 + $0x240] sm:$0xf] %v1779
  %1796 = vst [vmem:[#allocation3 + $0x248] sm:$0xf] %v1780
  %1797 = vst [vmem:[#allocation3 + $0x250] sm:$0xf] %v1781
  %1798 = vst [vmem:[#allocation3 + $0x258] sm:$0xf] %v1782
  %1799 = vst [vmem:[#allocation3 + $0x260] sm:$0xf] %v1783
  %1800 = vst [vmem:[#allocation3 + $0x268] sm:$0xf] %v1784
  %1801 = vst [vmem:[#allocation3 + $0x270] sm:$0xf] %v1785
  %1802 = vst [vmem:[#allocation3 + $0x278] sm:$0xf] %v1786
  %v1803 = vld [vmem:[%s1] sm:$0xf]
  %v1804 = vld [vmem:[#allocation3] sm:$0xff]
  %v1805 = vld [vmem:[#allocation3 + $0x8] sm:$0xff]
  %v1806 = vld [vmem:[#allocation3 + $0x10] sm:$0xff]
  %v1807 = vld [vmem:[#allocation3 + $0x18] sm:$0xff]
  %v1808 = vld [vmem:[#allocation3 + $0x20] sm:$0xff]
  %v1809 = vld [vmem:[#allocation3 + $0x28] sm:$0xff]
  %v1810 = vld [vmem:[#allocation3 + $0x30] sm:$0xff]
  %v1811 = vld [vmem:[#allocation3 + $0x38] sm:$0xff]
  %v1812 = vld [vmem:[#allocation3 + $0x40] sm:$0xff]
  %v1813 = vld [vmem:[#allocation3 + $0x48] sm:$0xff]
  %v1814 = vld [vmem:[#allocation3 + $0x50] sm:$0xff]
  %v1815 = vld [vmem:[#allocation3 + $0x58] sm:$0xff]
  %v1816 = vld [vmem:[#allocation3 + $0x60] sm:$0xff]
  %v1817 = vld [vmem:[#allocation3 + $0x68] sm:$0xff]
  %v1818 = vld [vmem:[#allocation3 + $0x70] sm:$0xff]
  %v1819 = vld [vmem:[#allocation3 + $0x78] sm:$0xff]
  %v1820 = vld [vmem:[#allocation3 + $0x80] sm:$0xff]
  %v1821 = vld [vmem:[#allocation3 + $0x88] sm:$0xff]
  %v1822 = vld [vmem:[#allocation3 + $0x90] sm:$0xff]
  %v1823 = vld [vmem:[#allocation3 + $0x98] sm:$0xff]
  %v1824 = vld [vmem:[#allocation3 + $0xa0] sm:$0xff]
  %v1825 = vld [vmem:[#allocation3 + $0xa8] sm:$0xff]
  %v1826 = vld [vmem:[#allocation3 + $0xb0] sm:$0xff]
  %v1827 = vld [vmem:[#allocation3 + $0xb8] sm:$0xff]
  %v1828 = vld [vmem:[#allocation3 + $0xc0] sm:$0xff]
  %v1829 = vld [vmem:[#allocation3 + $0xc8] sm:$0xff]
  %v1830 = vld [vmem:[#allocation3 + $0xd0] sm:$0xff]
  %v1831 = vld [vmem:[#allocation3 + $0xd8] sm:$0xff]
  %v1832 = vld [vmem:[#allocation3 + $0xe0] sm:$0xff]
  %v1833 = vld [vmem:[#allocation3 + $0xe8] sm:$0xff]
  %v1834 = vld [vmem:[#allocation3 + $0xf0] sm:$0xff]
  %v1835 = vld [vmem:[#allocation3 + $0xf8] sm:$0xff]
  %v1836 = vld [vmem:[#allocation3 + $0x100] sm:$0xff]
  %v1837 = vld [vmem:[#allocation3 + $0x108] sm:$0xff]
  %v1838 = vld [vmem:[#allocation3 + $0x110] sm:$0xff]
  %v1839 = vld [vmem:[#allocation3 + $0x118] sm:$0xff]
  %v1840 = vld [vmem:[#allocation3 + $0x120] sm:$0xff]
  %v1841 = vld [vmem:[#allocation3 + $0x128] sm:$0xff]
  %v1842 = vld [vmem:[#allocation3 + $0x130] sm:$0xff]
  %v1843 = vld [vmem:[#allocation3 + $0x138] sm:$0xff]
  %v1844 = vld [vmem:[#allocation3 + $0x140] sm:$0xff]
  %v1845 = vld [vmem:[#allocation3 + $0x148] sm:$0xff]
  %v1846 = vld [vmem:[#allocation3 + $0x150] sm:$0xff]
  %v1847 = vld [vmem:[#allocation3 + $0x158] sm:$0xff]
  %v1848 = vld [vmem:[#allocation3 + $0x160] sm:$0xff]
  %v1849 = vld [vmem:[#allocation3 + $0x168] sm:$0xff]
  %v1850 = vld [vmem:[#allocation3 + $0x170] sm:$0xff]
  %v1851 = vld [vmem:[#allocation3 + $0x178] sm:$0xff]
  %v1852 = vld [vmem:[#allocation3 + $0x180] sm:$0xff]
  %v1853 = vld [vmem:[#allocation3 + $0x188] sm:$0xff]
  %v1854 = vld [vmem:[#allocation3 + $0x190] sm:$0xff]
  %v1855 = vld [vmem:[#allocation3 + $0x198] sm:$0xff]
  %v1856 = vld [vmem:[#allocation3 + $0x1a0] sm:$0xff]
  %v1857 = vld [vmem:[#allocation3 + $0x1a8] sm:$0xff]
  %v1858 = vld [vmem:[#allocation3 + $0x1b0] sm:$0xff]
  %v1859 = vld [vmem:[#allocation3 + $0x1b8] sm:$0xff]
  %v1860 = vld [vmem:[#allocation3 + $0x1c0] sm:$0xff]
  %v1861 = vld [vmem:[#allocation3 + $0x1c8] sm:$0xff]
  %v1862 = vld [vmem:[#allocation3 + $0x1d0] sm:$0xff]
  %v1863 = vld [vmem:[#allocation3 + $0x1d8] sm:$0xff]
  %v1864 = vld [vmem:[#allocation3 + $0x1e0] sm:$0xff]
  %v1865 = vld [vmem:[#allocation3 + $0x1e8] sm:$0xff]
  %v1866 = vld [vmem:[#allocation3 + $0x1f0] sm:$0xff]
  %v1867 = vld [vmem:[#allocation3 + $0x1f8] sm:$0xff]
  %v1868 = vld [vmem:[#allocation3 + $0x200] sm:$0xf]
  %v1869 = vld [vmem:[#allocation3 + $0x208] sm:$0xf]
  %v1870 = vld [vmem:[#allocation3 + $0x210] sm:$0xf]
  %v1871 = vld [vmem:[#allocation3 + $0x218] sm:$0xf]
  %v1872 = vld [vmem:[#allocation3 + $0x220] sm:$0xf]
  %v1873 = vld [vmem:[#allocation3 + $0x228] sm:$0xf]
  %v1874 = vld [vmem:[#allocation3 + $0x230] sm:$0xf]
  %v1875 = vld [vmem:[#allocation3 + $0x238] sm:$0xf]
  %v1876 = vld [vmem:[#allocation3 + $0x240] sm:$0xf]
  %v1877 = vld [vmem:[#allocation3 + $0x248] sm:$0xf]
  %v1878 = vld [vmem:[#allocation3 + $0x250] sm:$0xf]
  %v1879 = vld [vmem:[#allocation3 + $0x258] sm:$0xf]
  %v1880 = vld [vmem:[#allocation3 + $0x260] sm:$0xf]
  %v1881 = vld [vmem:[#allocation3 + $0x268] sm:$0xf]
  %v1882 = vld [vmem:[#allocation3 + $0x270] sm:$0xf]
  %v1883 = vld [vmem:[#allocation3 + $0x278] sm:$0xf]
  %vm1884 = vcmask 293888
  %v1886 = vsel %vm1884, %v1803, 0
  %v1889 = vsel %vm49, %v1868, 0
  %v1892 = vsel %vm49, %v1869, 0
  %v1895 = vsel %vm49, %v1870, 0
  %v1898 = vsel %vm49, %v1871, 0
  %v1901 = vsel %vm49, %v1872, 0
  %v1904 = vsel %vm49, %v1873, 0
  %v1907 = vsel %vm49, %v1874, 0
  %v1910 = vsel %vm49, %v1875, 0
  %v1913 = vsel %vm49, %v1876, 0
  %v1916 = vsel %vm49, %v1877, 0
  %v1919 = vsel %vm49, %v1878, 0
  %v1922 = vsel %vm49, %v1879, 0
  %v1925 = vsel %vm49, %v1880, 0
  %v1928 = vsel %vm49, %v1881, 0
  %v1931 = vsel %vm49, %v1882, 0
  %v1934 = vsel %vm49, %v1883, 0
  %1936 = vmatpush.msra.mxu0 0.0
  %1937 = vmatpush.msra.mxu0 0.0
  %1938 = vmatpush.msra.mxu0 0.0
  %1939 = vmatpush.msra.mxu0 0.0
  %1940 = vmatpush.msra.mxu0 0.0
  %1941 = vmatpush.msra.mxu0 0.0
  %1942 = vmatpush.msra.mxu0 0.0
  %1943 = vmatpush.msra.mxu0 0.0
  %1944 = vmatpush.msra.mxu0 0.0
  %1945 = vmatpush.msra.mxu0 0.0
  %1946 = vmatpush.msra.mxu0 0.0
  %1947 = vmatpush.msra.mxu0 %v1889
  %1948 = vmatpush.msra.mxu0 %v1852
  %1949 = vmatpush.msra.mxu0 %v1836
  %1950 = vmatpush.msra.mxu0 %v1820
  %1951 = vmatpush.msra.mxu0 %v1804
  %1952 = vmatmul.f32.gmra.mxu0 %v1886
  %v1953 = vpop.f32.mrf.mxu0
  %v1954 = vadd.f32 0.0, %v1953
  %1955 = vdwg.mxu0
  %1956 = vmatpush.msra.mxu0 0.0
  %1957 = vmatpush.msra.mxu0 0.0
  %1958 = vmatpush.msra.mxu0 0.0
  %1959 = vmatpush.msra.mxu0 0.0
  %1960 = vmatpush.msra.mxu0 0.0
  %1961 = vmatpush.msra.mxu0 0.0
  %1962 = vmatpush.msra.mxu0 0.0
  %1963 = vmatpush.msra.mxu0 0.0
  %1964 = vmatpush.msra.mxu0 0.0
  %1965 = vmatpush.msra.mxu0 0.0
  %1966 = vmatpush.msra.mxu0 0.0
  %1967 = vmatpush.msra.mxu0 %v1892
  %1968 = vmatpush.msra.mxu0 %v1853
  %1969 = vmatpush.msra.mxu0 %v1837
  %1970 = vmatpush.msra.mxu0 %v1821
  %1971 = vmatpush.msra.mxu0 %v1805
  %1972 = vmatmul.f32.gmra.mxu0 %v1886
  %v1973 = vpop.f32.mrf.mxu0
  %v1974 = vadd.f32 0.0, %v1973
  %1975 = vdwg.mxu0
  %1976 = vmatpush.msra.mxu0 0.0
  %1977 = vmatpush.msra.mxu0 0.0
  %1978 = vmatpush.msra.mxu0 0.0
  %1979 = vmatpush.msra.mxu0 0.0
  %1980 = vmatpush.msra.mxu0 0.0
  %1981 = vmatpush.msra.mxu0 0.0
  %1982 = vmatpush.msra.mxu0 0.0
  %1983 = vmatpush.msra.mxu0 0.0
  %1984 = vmatpush.msra.mxu0 0.0
  %1985 = vmatpush.msra.mxu0 0.0
  %1986 = vmatpush.msra.mxu0 0.0
  %1987 = vmatpush.msra.mxu0 %v1895
  %1988 = vmatpush.msra.mxu0 %v1854
  %1989 = vmatpush.msra.mxu0 %v1838
  %1990 = vmatpush.msra.mxu0 %v1822
  %1991 = vmatpush.msra.mxu0 %v1806
  %1992 = vmatmul.f32.gmra.mxu0 %v1886
  %v1993 = vpop.f32.mrf.mxu0
  %v1994 = vadd.f32 0.0, %v1993
  %1995 = vdwg.mxu0
  %1996 = vmatpush.msra.mxu0 0.0
  %1997 = vmatpush.msra.mxu0 0.0
  %1998 = vmatpush.msra.mxu0 0.0
  %1999 = vmatpush.msra.mxu0 0.0
  %2000 = vmatpush.msra.mxu0 0.0
  %2001 = vmatpush.msra.mxu0 0.0
  %2002 = vmatpush.msra.mxu0 0.0
  %2003 = vmatpush.msra.mxu0 0.0
  %2004 = vmatpush.msra.mxu0 0.0
  %2005 = vmatpush.msra.mxu0 0.0
  %2006 = vmatpush.msra.mxu0 0.0
  %2007 = vmatpush.msra.mxu0 %v1898
  %2008 = vmatpush.msra.mxu0 %v1855
  %2009 = vmatpush.msra.mxu0 %v1839
  %2010 = vmatpush.msra.mxu0 %v1823
  %2011 = vmatpush.msra.mxu0 %v1807
  %2012 = vmatmul.f32.gmra.mxu0 %v1886
  %v2013 = vpop.f32.mrf.mxu0
  %v2014 = vadd.f32 0.0, %v2013
  %2015 = vdwg.mxu0
  %2016 = vmatpush.msra.mxu0 0.0
  %2017 = vmatpush.msra.mxu0 0.0
  %2018 = vmatpush.msra.mxu0 0.0
  %2019 = vmatpush.msra.mxu0 0.0
  %2020 = vmatpush.msra.mxu0 0.0
  %2021 = vmatpush.msra.mxu0 0.0
  %2022 = vmatpush.msra.mxu0 0.0
  %2023 = vmatpush.msra.mxu0 0.0
  %2024 = vmatpush.msra.mxu0 0.0
  %2025 = vmatpush.msra.mxu0 0.0
  %2026 = vmatpush.msra.mxu0 0.0
  %2027 = vmatpush.msra.mxu0 %v1901
  %2028 = vmatpush.msra.mxu0 %v1856
  %2029 = vmatpush.msra.mxu0 %v1840
  %2030 = vmatpush.msra.mxu0 %v1824
  %2031 = vmatpush.msra.mxu0 %v1808
  %2032 = vmatmul.f32.gmra.mxu0 %v1886
  %v2033 = vpop.f32.mrf.mxu0
  %v2034 = vadd.f32 0.0, %v2033
  %2035 = vdwg.mxu0
  %2036 = vmatpush.msra.mxu0 0.0
  %2037 = vmatpush.msra.mxu0 0.0
  %2038 = vmatpush.msra.mxu0 0.0
  %2039 = vmatpush.msra.mxu0 0.0
  %2040 = vmatpush.msra.mxu0 0.0
  %2041 = vmatpush.msra.mxu0 0.0
  %2042 = vmatpush.msra.mxu0 0.0
  %2043 = vmatpush.msra.mxu0 0.0
  %2044 = vmatpush.msra.mxu0 0.0
  %2045 = vmatpush.msra.mxu0 0.0
  %2046 = vmatpush.msra.mxu0 0.0
  %2047 = vmatpush.msra.mxu0 %v1904
  %2048 = vmatpush.msra.mxu0 %v1857
  %2049 = vmatpush.msra.mxu0 %v1841
  %2050 = vmatpush.msra.mxu0 %v1825
  %2051 = vmatpush.msra.mxu0 %v1809
  %2052 = vmatmul.f32.gmra.mxu0 %v1886
  %v2053 = vpop.f32.mrf.mxu0
  %v2054 = vadd.f32 0.0, %v2053
  %2055 = vdwg.mxu0
  %2056 = vmatpush.msra.mxu0 0.0
  %2057 = vmatpush.msra.mxu0 0.0
  %2058 = vmatpush.msra.mxu0 0.0
  %2059 = vmatpush.msra.mxu0 0.0
  %2060 = vmatpush.msra.mxu0 0.0
  %2061 = vmatpush.msra.mxu0 0.0
  %2062 = vmatpush.msra.mxu0 0.0
  %2063 = vmatpush.msra.mxu0 0.0
  %2064 = vmatpush.msra.mxu0 0.0
  %2065 = vmatpush.msra.mxu0 0.0
  %2066 = vmatpush.msra.mxu0 0.0
  %2067 = vmatpush.msra.mxu0 %v1907
  %2068 = vmatpush.msra.mxu0 %v1858
  %2069 = vmatpush.msra.mxu0 %v1842
  %2070 = vmatpush.msra.mxu0 %v1826
  %2071 = vmatpush.msra.mxu0 %v1810
  %2072 = vmatmul.f32.gmra.mxu0 %v1886
  %v2073 = vpop.f32.mrf.mxu0
  %v2074 = vadd.f32 0.0, %v2073
  %2075 = vdwg.mxu0
  %2076 = vmatpush.msra.mxu0 0.0
  %2077 = vmatpush.msra.mxu0 0.0
  %2078 = vmatpush.msra.mxu0 0.0
  %2079 = vmatpush.msra.mxu0 0.0
  %2080 = vmatpush.msra.mxu0 0.0
  %2081 = vmatpush.msra.mxu0 0.0
  %2082 = vmatpush.msra.mxu0 0.0
  %2083 = vmatpush.msra.mxu0 0.0
  %2084 = vmatpush.msra.mxu0 0.0
  %2085 = vmatpush.msra.mxu0 0.0
  %2086 = vmatpush.msra.mxu0 0.0
  %2087 = vmatpush.msra.mxu0 %v1910
  %2088 = vmatpush.msra.mxu0 %v1859
  %2089 = vmatpush.msra.mxu0 %v1843
  %2090 = vmatpush.msra.mxu0 %v1827
  %2091 = vmatpush.msra.mxu0 %v1811
  %2092 = vmatmul.f32.gmra.mxu0 %v1886
  %v2093 = vpop.f32.mrf.mxu0
  %v2094 = vadd.f32 0.0, %v2093
  %2095 = vdwg.mxu0
  %2096 = vmatpush.msra.mxu0 0.0
  %2097 = vmatpush.msra.mxu0 0.0
  %2098 = vmatpush.msra.mxu0 0.0
  %2099 = vmatpush.msra.mxu0 0.0
  %2100 = vmatpush.msra.mxu0 0.0
  %2101 = vmatpush.msra.mxu0 0.0
  %2102 = vmatpush.msra.mxu0 0.0
  %2103 = vmatpush.msra.mxu0 0.0
  %2104 = vmatpush.msra.mxu0 0.0
  %2105 = vmatpush.msra.mxu0 0.0
  %2106 = vmatpush.msra.mxu0 0.0
  %2107 = vmatpush.msra.mxu0 %v1913
  %2108 = vmatpush.msra.mxu0 %v1860
  %2109 = vmatpush.msra.mxu0 %v1844
  %2110 = vmatpush.msra.mxu0 %v1828
  %2111 = vmatpush.msra.mxu0 %v1812
  %2112 = vmatmul.f32.gmra.mxu0 %v1886
  %v2113 = vpop.f32.mrf.mxu0
  %v2114 = vadd.f32 0.0, %v2113
  %2115 = vdwg.mxu0
  %2116 = vmatpush.msra.mxu0 0.0
  %2117 = vmatpush.msra.mxu0 0.0
  %2118 = vmatpush.msra.mxu0 0.0
  %2119 = vmatpush.msra.mxu0 0.0
  %2120 = vmatpush.msra.mxu0 0.0
  %2121 = vmatpush.msra.mxu0 0.0
  %2122 = vmatpush.msra.mxu0 0.0
  %2123 = vmatpush.msra.mxu0 0.0
  %2124 = vmatpush.msra.mxu0 0.0
  %2125 = vmatpush.msra.mxu0 0.0
  %2126 = vmatpush.msra.mxu0 0.0
  %2127 = vmatpush.msra.mxu0 %v1916
  %2128 = vmatpush.msra.mxu0 %v1861
  %2129 = vmatpush.msra.mxu0 %v1845
  %2130 = vmatpush.msra.mxu0 %v1829
  %2131 = vmatpush.msra.mxu0 %v1813
  %2132 = vmatmul.f32.gmra.mxu0 %v1886
  %v2133 = vpop.f32.mrf.mxu0
  %v2134 = vadd.f32 0.0, %v2133
  %2135 = vdwg.mxu0
  %2136 = vmatpush.msra.mxu0 0.0
  %2137 = vmatpush.msra.mxu0 0.0
  %2138 = vmatpush.msra.mxu0 0.0
  %2139 = vmatpush.msra.mxu0 0.0
  %2140 = vmatpush.msra.mxu0 0.0
  %2141 = vmatpush.msra.mxu0 0.0
  %2142 = vmatpush.msra.mxu0 0.0
  %2143 = vmatpush.msra.mxu0 0.0
  %2144 = vmatpush.msra.mxu0 0.0
  %2145 = vmatpush.msra.mxu0 0.0
  %2146 = vmatpush.msra.mxu0 0.0
  %2147 = vmatpush.msra.mxu0 %v1919
  %2148 = vmatpush.msra.mxu0 %v1862
  %2149 = vmatpush.msra.mxu0 %v1846
  %2150 = vmatpush.msra.mxu0 %v1830
  %2151 = vmatpush.msra.mxu0 %v1814
  %2152 = vmatmul.f32.gmra.mxu0 %v1886
  %v2153 = vpop.f32.mrf.mxu0
  %v2154 = vadd.f32 0.0, %v2153
  %2155 = vdwg.mxu0
  %2156 = vmatpush.msra.mxu0 0.0
  %2157 = vmatpush.msra.mxu0 0.0
  %2158 = vmatpush.msra.mxu0 0.0
  %2159 = vmatpush.msra.mxu0 0.0
  %2160 = vmatpush.msra.mxu0 0.0
  %2161 = vmatpush.msra.mxu0 0.0
  %2162 = vmatpush.msra.mxu0 0.0
  %2163 = vmatpush.msra.mxu0 0.0
  %2164 = vmatpush.msra.mxu0 0.0
  %2165 = vmatpush.msra.mxu0 0.0
  %2166 = vmatpush.msra.mxu0 0.0
  %2167 = vmatpush.msra.mxu0 %v1922
  %2168 = vmatpush.msra.mxu0 %v1863
  %2169 = vmatpush.msra.mxu0 %v1847
  %2170 = vmatpush.msra.mxu0 %v1831
  %2171 = vmatpush.msra.mxu0 %v1815
  %2172 = vmatmul.f32.gmra.mxu0 %v1886
  %v2173 = vpop.f32.mrf.mxu0
  %v2174 = vadd.f32 0.0, %v2173
  %2175 = vdwg.mxu0
  %2176 = vmatpush.msra.mxu0 0.0
  %2177 = vmatpush.msra.mxu0 0.0
  %2178 = vmatpush.msra.mxu0 0.0
  %2179 = vmatpush.msra.mxu0 0.0
  %2180 = vmatpush.msra.mxu0 0.0
  %2181 = vmatpush.msra.mxu0 0.0
  %2182 = vmatpush.msra.mxu0 0.0
  %2183 = vmatpush.msra.mxu0 0.0
  %2184 = vmatpush.msra.mxu0 0.0
  %2185 = vmatpush.msra.mxu0 0.0
  %2186 = vmatpush.msra.mxu0 0.0
  %2187 = vmatpush.msra.mxu0 %v1925
  %2188 = vmatpush.msra.mxu0 %v1864
  %2189 = vmatpush.msra.mxu0 %v1848
  %2190 = vmatpush.msra.mxu0 %v1832
  %2191 = vmatpush.msra.mxu0 %v1816
  %2192 = vmatmul.f32.gmra.mxu0 %v1886
  %v2193 = vpop.f32.mrf.mxu0
  %v2194 = vadd.f32 0.0, %v2193
  %2195 = vdwg.mxu0
  %2196 = vmatpush.msra.mxu0 0.0
  %2197 = vmatpush.msra.mxu0 0.0
  %2198 = vmatpush.msra.mxu0 0.0
  %2199 = vmatpush.msra.mxu0 0.0
  %2200 = vmatpush.msra.mxu0 0.0
  %2201 = vmatpush.msra.mxu0 0.0
  %2202 = vmatpush.msra.mxu0 0.0
  %2203 = vmatpush.msra.mxu0 0.0
  %2204 = vmatpush.msra.mxu0 0.0
  %2205 = vmatpush.msra.mxu0 0.0
  %2206 = vmatpush.msra.mxu0 0.0
  %2207 = vmatpush.msra.mxu0 %v1928
  %2208 = vmatpush.msra.mxu0 %v1865
  %2209 = vmatpush.msra.mxu0 %v1849
  %2210 = vmatpush.msra.mxu0 %v1833
  %2211 = vmatpush.msra.mxu0 %v1817
  %2212 = vmatmul.f32.gmra.mxu0 %v1886
  %v2213 = vpop.f32.mrf.mxu0
  %v2214 = vadd.f32 0.0, %v2213
  %2215 = vdwg.mxu0
  %2216 = vmatpush.msra.mxu0 0.0
  %2217 = vmatpush.msra.mxu0 0.0
  %2218 = vmatpush.msra.mxu0 0.0
  %2219 = vmatpush.msra.mxu0 0.0
  %2220 = vmatpush.msra.mxu0 0.0
  %2221 = vmatpush.msra.mxu0 0.0
  %2222 = vmatpush.msra.mxu0 0.0
  %2223 = vmatpush.msra.mxu0 0.0
  %2224 = vmatpush.msra.mxu0 0.0
  %2225 = vmatpush.msra.mxu0 0.0
  %2226 = vmatpush.msra.mxu0 0.0
  %2227 = vmatpush.msra.mxu0 %v1931
  %2228 = vmatpush.msra.mxu0 %v1866
  %2229 = vmatpush.msra.mxu0 %v1850
  %2230 = vmatpush.msra.mxu0 %v1834
  %2231 = vmatpush.msra.mxu0 %v1818
  %2232 = vmatmul.f32.gmra.mxu0 %v1886
  %v2233 = vpop.f32.mrf.mxu0
  %v2234 = vadd.f32 0.0, %v2233
  %2235 = vdwg.mxu0
  %2236 = vmatpush.msra.mxu0 0.0
  %2237 = vmatpush.msra.mxu0 0.0
  %2238 = vmatpush.msra.mxu0 0.0
  %2239 = vmatpush.msra.mxu0 0.0
  %2240 = vmatpush.msra.mxu0 0.0
  %2241 = vmatpush.msra.mxu0 0.0
  %2242 = vmatpush.msra.mxu0 0.0
  %2243 = vmatpush.msra.mxu0 0.0
  %2244 = vmatpush.msra.mxu0 0.0
  %2245 = vmatpush.msra.mxu0 0.0
  %2246 = vmatpush.msra.mxu0 0.0
  %2247 = vmatpush.msra.mxu0 %v1934
  %2248 = vmatpush.msra.mxu0 %v1867
  %2249 = vmatpush.msra.mxu0 %v1851
  %2250 = vmatpush.msra.mxu0 %v1835
  %2251 = vmatpush.msra.mxu0 %v1819
  %2252 = vmatmul.f32.gmra.mxu0 %v1886
  %v2253 = vpop.f32.mrf.mxu0
  %v2254 = vadd.f32 0.0, %v2253
  %2255 = vdwg.mxu0
  %v2272 = vrot.slane %v1974, 4
  %v2273 = vrot.slane %v2014, 4
  %v2274 = vrot.slane %v2054, 4
  %v2275 = vrot.slane %v2094, 4
  %v2276 = vrot.slane %v2134, 4
  %v2277 = vrot.slane %v2174, 4
  %v2278 = vrot.slane %v2214, 4
  %v2279 = vrot.slane %v2254, 4
  %v2280 = vsel %vm49, %v1954, %v2272
  %v2281 = vsel %vm49, %v1994, %v2273
  %v2282 = vsel %vm49, %v2034, %v2274
  %v2283 = vsel %vm49, %v2074, %v2275
  %v2284 = vsel %vm49, %v2114, %v2276
  %v2285 = vsel %vm49, %v2154, %v2277
  %v2286 = vsel %vm49, %v2194, %v2278
  %v2287 = vsel %vm49, %v2234, %v2279
  %2296 = vst [vmem:[#allocation4] sm:$0xff] %v2280
  %2297 = vst [vmem:[#allocation4 + $0x8] sm:$0xff] %v2281
  %2298 = vst [vmem:[#allocation4 + $0x10] sm:$0xff] %v2282
  %2299 = vst [vmem:[#allocation4 + $0x18] sm:$0xff] %v2283
  %2300 = vst [vmem:[#allocation4 + $0x20] sm:$0xff] %v2284
  %2301 = vst [vmem:[#allocation4 + $0x28] sm:$0xff] %v2285
  %2302 = vst [vmem:[#allocation4 + $0x30] sm:$0xff] %v2286
  %2303 = vst [vmem:[#allocation4 + $0x38] sm:$0xff] %v2287
  %v2304 = vld [vmem:[#allocation4] sm:$0xff]
  %v2305 = vld [vmem:[#allocation4 + $0x8] sm:$0xff]
  %v2306 = vld [vmem:[#allocation4 + $0x10] sm:$0xff]
  %v2307 = vld [vmem:[#allocation4 + $0x18] sm:$0xff]
  %v2308 = vld [vmem:[%s2] sm:$0xf]
  %2310 = vset.pattern.permute.xlu0 0
  %2311 = vperm.xlu0 %2310, %v2308
  %v2312 = vpop.permute.xlu0 %2311
  %v2314 = vunpack.c.l.s4 839922192
  %v2315 = vunpack.c.0.s8 %v2314
  %v2316 = vperm.slane %v2312, %v2315
  %v2318 = vadd.f32 %v2304, %v2316
  %v2319 = vadd.f32 %v2305, %v2316
  %v2320 = vadd.f32 %v2306, %v2316
  %v2321 = vadd.f32 %v2307, %v2316
  %2322 = vst [vmem:[%s4] sm:$0xff] %v2318
  %2323 = vst [vmem:[%s4 + $0x8] sm:$0xff] %v2319
  %2324 = vst [vmem:[%s4 + $0x10] sm:$0xff] %v2320
  %2325 = vst [vmem:[%s4 + $0x18] sm:$0xff] %v2321
  %v2326 = vld [vmem:[#allocation4 + $0x20] sm:$0xff]
  %v2327 = vld [vmem:[#allocation4 + $0x28] sm:$0xff]
  %v2328 = vld [vmem:[#allocation4 + $0x30] sm:$0xff]
  %v2329 = vld [vmem:[#allocation4 + $0x38] sm:$0xff]
  %v2330 = vld [vmem:[%s2] sm:$0xf]
  %2332 = vset.pattern.permute.xlu0 0
  %2333 = vperm.xlu0 %2332, %v2330
  %v2334 = vpop.permute.xlu0 %2333
  %v2336 = vunpack.c.l.s4 839922192
  %v2337 = vunpack.c.0.s8 %v2336
  %v2338 = vperm.slane %v2334, %v2337
  %v2340 = vadd.f32 %v2326, %v2338
  %v2341 = vadd.f32 %v2327, %v2338
  %v2342 = vadd.f32 %v2328, %v2338
  %v2343 = vadd.f32 %v2329, %v2338
  %s2344 = scalar_lea.vmem %s4, 32
  %2345 = vst [vmem:[%s2344] sm:$0xff] %v2340
  %2346 = vst [vmem:[%s2344 + $0x8] sm:$0xff] %v2341
  %2347 = vst [vmem:[%s2344 + $0x10] sm:$0xff] %v2342
  %2348 = vst [vmem:[%s2344 + $0x18] sm:$0xff] %v2343
  // Predicated region
  $region18: #{inverse_maxpool2d.1} parent=0 // pred_check
    _
  $region19: #{inverse_maxpool2d.1} parent=0 // pred_check_branch
    %2350 = sbr.rel (0) target = $region21
  $region20: #{inverse_maxpool2d.1} parent=0 // pred_region
    _
  $region21: #{inverse_maxpool2d.1} parent=0 // pred_fallthru
    _
  // Predicated region
  $region22: #{inverse_maxpool2d.1} parent=0 // pred_check
    _
  $region23: #{inverse_maxpool2d.1} parent=0 // pred_check_branch
    %2352 = sbr.rel (0) target = $region25
  $region24: #{inverse_maxpool2d.1} parent=0 // pred_region
    _
  $region25: #{inverse_maxpool2d.1} parent=0 // pred_fallthru
    _

</llo_original>
